<compile_context>
chip_gen: v5e
topology: v5e:2x2
jax: 0.10.0
libtpu: 0.0.40
codegen_flags: <defaults>
</compile_context>

<pallas_src>
import functools

import jax
import jax.numpy as jnp
from jax.experimental import pallas as pl
from jax.experimental.pallas import tpu as pltpu


# ----------------------------------------------------------------------------- helpers
def _round_up(n, m):
    return ((n + m - 1) // m) * m


def _cdiv(a, b):
    return -(-a // b)


def _tpu_kind():
    try:
        return jax.devices()[0].device_kind.lower()
    except Exception:
        return ""


def _num_parallel_cores(kind):
    # v7x has 2 TensorCores per chip; v4/v5p megacore shares the grid across 2 cores.
    return 2 if any(t in kind for t in ("v7", "7x", "v4", "v5p")) else 1


def _has_bf16_vpu(kind):
    # v6e / v7x have bf16 VALUs; v5e (and older) do not -> keep f32 activations there.
    return any(t in kind for t in ("v6", "v7", "7x"))


def _is_v5e(kind):
    return ("v5e" in kind) or ("v5 lite" in kind) or ("v5lite" in kind)


def _pick_tiles(B, tile_cap, cores, kind):
    """Choose (batch_tile, num_tiles) minimizing padding, megacore-aware."""
    B128 = _round_up(max(int(B), 1), 128)
    n = _cdiv(B128, tile_cap)
    if cores > 1 and B128 >= cores * 128:
        # Keep >= `cores` tiles (a multiple of `cores`) so both TCs get work.
        n = _round_up(max(n, cores), cores)
    tb = _round_up(_cdiv(B128, n), 128)
    # v5e: 4 x 128-wide MXUs -> keep wide tiles a multiple of 512 lanes.
    if _is_v5e(kind) and tb > 512:
        tb = _round_up(tb, 512)
    return tb, n


# ----------------------------------------------------------------------------- kernel
def critic_kernel(x_ref,
                  w1_ref, b1_ref,
                  w2_ref, b2_ref,
                  w3_ref, b3_ref,
                  w4_ref, b4_ref,
                  o_ref, *, bf16_act):
    """Fused 4-layer MLP on one batch tile.

    x_ref:  [TB, F]  f32 (cast to bf16 in-kernel; transpose folded into dot_general)
    w1..w3: bf16 [out, in] (PyTorch layout), biases f32 [out, 1] columns
    w4_ref: [H, 1] f32 column (final layer runs on VPU + sublane reduce, not MXU)
    b4_ref: (1,)   f32 scalar in SMEM
    o_ref:  [1, TB] f32 (lane-dense store)
    """
    bf16 = jnp.bfloat16
    f32 = jnp.float32

    def bias_relu(z, b_ref):
        if bf16_act:  # compile-time flag: bf16 VALU path (v6e/v7x)
            return jnp.maximum(z.astype(bf16) + b_ref[...].astype(bf16), 0.0)
        return jnp.maximum(z + b_ref[...], 0.0)

    # Layer 1: contract feature axis of x (dim 1) with w1's dim 1 -> [H, TB].
    xb = x_ref[...].astype(bf16)                                       # [TB, F]
    h = jax.lax.dot_general(w1_ref[...], xb,
                            dimension_numbers=(((1,), (1,)), ((), ())),
                            preferred_element_type=f32)                # [H, TB]
    h = bias_relu(h, b1_ref)

    h = jnp.dot(w2_ref[...], h.astype(bf16), preferred_element_type=f32)
    h = bias_relu(h, b2_ref)

    h = jnp.dot(w3_ref[...], h.astype(bf16), preferred_element_type=f32)
    h = bias_relu(h, b3_ref)

    # Layer 4 (out_features = 1): VPU multiply + sublane reduce instead of an
    # MXU pass that would waste 255/256 of the systolic tile.
    y = jnp.sum(h.astype(f32) * w4_ref[...], axis=0, keepdims=True)    # [1, TB]
    o_ref[...] = (y + b4_ref[0]).astype(o_ref.dtype)                   # lane-dense


# ----------------------------------------------------------------------------- wrapper
def critic_forward(x, kparams, *, tile_b=2048):
    """x: [B, F] float32 -> [B, 1] float32 (same semantics as the PyTorch module)."""
    B, F = x.shape
    H = kparams["w1"].shape[0]

    kind = _tpu_kind()
    cores = _num_parallel_cores(kind)
    bf16_act = _has_bf16_vpu(kind)

    tile_cap = max(128, _round_up(int(tile_b), 128))
    tb, num_tiles = _pick_tiles(B, tile_cap, cores, kind)
    Bp = tb * num_tiles

    # Wrapper does *only* a batch pad; cast + transpose are folded into the kernel.
    xp = x if Bp == B else jnp.pad(x, ((0, Bp - B), (0, 0)))

    vmem = pl.BlockSpec(memory_space=pltpu.MemorySpace.VMEM)  # resident weights/biases
    smem = pl.BlockSpec(memory_space=pltpu.MemorySpace.SMEM)  # scalar b4

    flops = 2 * Bp * (F * H + H * H + H * H + H)
    bytes_accessed = (
        xp.size * xp.dtype.itemsize + Bp * 4
        + sum(int(v.size) * v.dtype.itemsize for v in kparams.values()))

    out = pl.pallas_call(
        functools.partial(critic_kernel, bf16_act=bf16_act),
        out_shape=jax.ShapeDtypeStruct((1, Bp), jnp.float32),
        grid=(num_tiles,),
        in_specs=[
            pl.BlockSpec((tb, F), lambda i: (i, 0)),  # x tile: batch on sublanes, F on lanes
            vmem, vmem,                               # w1 [H,F] bf16, b1 [H,1] f32
            vmem, vmem,                               # w2 [H,H] bf16, b2 [H,1] f32
            vmem, vmem,                               # w3 [H,H] bf16, b3 [H,1] f32
            vmem, smem,                               # w4 column [H,1] f32, b4 (1,) f32
        ],
        out_specs=pl.BlockSpec((1, tb), lambda i: (0, i)),    # lane-dense [1, tb]
        compiler_params=pltpu.CompilerParams(
            dimension_semantics=("parallel",)),
        cost_estimate=pl.CostEstimate(flops=flops, transcendentals=0,
                                      bytes_accessed=bytes_accessed),
    )(xp,
      kparams["w1"], kparams["b1"],
      kparams["w2"], kparams["b2"],
      kparams["w3"], kparams["b3"],
      kparams["w4col"], kparams["b4"])

    return out[0, :B].reshape(B, 1)


# ----------------------------------------------------------------------------- params / refs
def init_params(key, in_features, hidden=256, out_features=1):
    """Deterministic PyTorch-Linear-style init, native [out, in] layout, float32."""
    ks = jax.random.split(key, 8)

    def linear(kw, kb, fan_in, fan_out):
        bound = 1.0 / float(fan_in) ** 0.5
        w = jax.random.uniform(kw, (fan_out, fan_in), jnp.float32, -bound, bound)
        b = jax.random.uniform(kb, (fan_out,), jnp.float32, -bound, bound)
        return w, b

    w1, b1 = linear(ks[0], ks[1], in_features, hidden)
    w2, b2 = linear(ks[2], ks[3], hidden, hidden)
    w3, b3 = linear(ks[4], ks[5], hidden, hidden)
    w4, b4 = linear(ks[6], ks[7], hidden, out_features)
    return dict(w1=w1, b1=b1, w2=w2, b2=b2, w3=w3, b3=b3, w4=w4, b4=b4)


def to_kernel_params(p):
    """bf16 weights for the MXU layers, f32 column biases, f32 w4 column, scalar b4."""
    bf16 = jnp.bfloat16
    f32 = jnp.float32
    return dict(
        w1=p["w1"].astype(bf16), b1=p["b1"].reshape(-1, 1).astype(f32),
        w2=p["w2"].astype(bf16), b2=p["b2"].reshape(-1, 1).astype(f32),
        w3=p["w3"].astype(bf16), b3=p["b3"].reshape(-1, 1).astype(f32),
        w4col=p["w4"].astype(f32).reshape(-1, 1),     # [H, 1] for VPU+reduce final layer
        b4=p["b4"].reshape(-1).astype(f32),
    )


def critic_ref_f32(x, p):
    """Pure-JAX f32 reference of the PyTorch forward pass."""
    h = jnp.maximum(x @ p["w1"].T + p["b1"], 0.0)
    h = jnp.maximum(h @ p["w2"].T + p["b2"], 0.0)
    h = jnp.maximum(h @ p["w3"].T + p["b3"], 0.0)
    return h @ p["w4"].T + p["b4"]


def critic_ref_kernel_precision(x, p, *, bf16_act):
    """Pure-JAX reference matching the kernel's precision path (bf16 MXU inputs,
    f32 accumulation, optional bf16 bias+ReLU, f32 VPU final layer)."""
    bf16, f32 = jnp.bfloat16, jnp.float32
    h = x.astype(f32)
    for wk, bk in (("w1", "b1"), ("w2", "b2"), ("w3", "b3")):
        z = jnp.dot(h.astype(bf16), p[wk].astype(bf16).T, preferred_element_type=f32)
        if bf16_act:
            h = jnp.maximum(z.astype(bf16) + p[bk].astype(bf16), 0.0)
        else:
            h = jnp.maximum(z + p[bk], 0.0)
    y = jnp.sum(h.astype(f32) * p["w4"].astype(f32), axis=-1, keepdims=True)
    return y + p["b4"]


# ----------------------------------------------------------------------------- main
if __name__ == "__main__":
    # dims = {'o': 16, 'g': 8, 'u': 8}, use_goal=True -> in_features = 32
    dims = {"o": 16, "g": 8, "u": 8}
    in_features = dims["o"] + dims["g"] + dims["u"]

    key = jax.random.PRNGKey(0)
    k_x, k_x2, k_p = jax.random.split(key, 3)
    params = init_params(k_p, in_features)
    kparams = to_kernel_params(params)

    kind = _tpu_kind()
    bf16_act = _has_bf16_vpu(kind)

    # Small test: batch=8 (padded to one 128-lane tile; on 2-TC chips still one tile).
    x = jax.random.normal(k_x, (8, in_features), jnp.float32)
    out = jax.block_until_ready(critic_forward(x, kparams))
    assert out.shape == (8, 1), out.shape
    ref = critic_ref_kernel_precision(x, params, bf16_act=bf16_act)
    ref_f32 = critic_ref_f32(x, params)
    assert jnp.allclose(out, ref, atol=1e-2, rtol=1e-2), \
        float(jnp.max(jnp.abs(out - ref)))
    assert jnp.allclose(out, ref_f32, atol=5e-2, rtol=5e-2), \
        float(jnp.max(jnp.abs(out - ref_f32)))

    # Ragged multi-tile test: batch=300 with a forced small tile cap (several grid steps,
    # exercises padding + the megacore-aware tile split).
    x2 = jax.random.normal(k_x2, (300, in_features), jnp.float32)
    out2 = jax.block_until_ready(critic_forward(x2, kparams, tile_b=128))
    assert out2.shape == (300, 1), out2.shape
    ref2 = critic_ref_kernel_precision(x2, params, bf16_act=bf16_act)
    assert jnp.allclose(out2, ref2, atol=1e-2, rtol=1e-2), \
        float(jnp.max(jnp.abs(out2 - ref2)))

    print("KERNEL_OK")
</pallas_src>

<mosaic_0001>
module attributes {stable_mosaic.version = 11 : i64} {
  func.func @critic_kernel(%arg0: i32, %arg1: memref<128x32xf32, #tpu.memory_space<vmem>>, %arg2: memref<256x32xbf16, #tpu.memory_space<vmem>>, %arg3: memref<256x1xf32, #tpu.memory_space<vmem>>, %arg4: memref<256x256xbf16, #tpu.memory_space<vmem>>, %arg5: memref<256x1xf32, #tpu.memory_space<vmem>>, %arg6: memref<256x256xbf16, #tpu.memory_space<vmem>>, %arg7: memref<256x1xf32, #tpu.memory_space<vmem>>, %arg8: memref<256x1xf32, #tpu.memory_space<vmem>>, %arg9: memref<1xf32, #tpu.memory_space<smem>>, %arg10: memref<1x128xf32, #tpu.memory_space<vmem>>) attributes {dimension_semantics = [#tpu.dimension_semantics<parallel>], iteration_bounds = array<i64: 1>, scalar_prefetch = 0 : i64, scratch_operands = 0 : i64, tpu.core_type = #tpu.core_type<tc>, window_params = [{transform_indices = @transform_0, window_bounds = array<i64: 128, 32>}, {pipeline_mode = #tpu.pipeline_mode<synchronous>, transform_indices = @transform_1, window_bounds = array<i64: 256, 32>}, {pipeline_mode = #tpu.pipeline_mode<synchronous>, transform_indices = @transform_2, window_bounds = array<i64: 256, 1>}, {pipeline_mode = #tpu.pipeline_mode<synchronous>, transform_indices = @transform_3, window_bounds = array<i64: 256, 256>}, {pipeline_mode = #tpu.pipeline_mode<synchronous>, transform_indices = @transform_4, window_bounds = array<i64: 256, 1>}, {pipeline_mode = #tpu.pipeline_mode<synchronous>, transform_indices = @transform_5, window_bounds = array<i64: 256, 256>}, {pipeline_mode = #tpu.pipeline_mode<synchronous>, transform_indices = @transform_6, window_bounds = array<i64: 256, 1>}, {pipeline_mode = #tpu.pipeline_mode<synchronous>, transform_indices = @transform_7, window_bounds = array<i64: 256, 1>}, {transform_indices = @transform_8, window_bounds = array<i64: 1>}, {transform_indices = @transform_9, window_bounds = array<i64: 1, 128>}]} {
    %c0 = arith.constant 0 : index
    %c0_0 = arith.constant 0 : index
    %0 = vector.load %arg1[%c0, %c0_0] : memref<128x32xf32, #tpu.memory_space<vmem>>, vector<128x32xf32>
    %1 = arith.truncf %0 : vector<128x32xf32> to vector<128x32xbf16>
    %c0_1 = arith.constant 0 : index
    %c0_2 = arith.constant 0 : index
    %2 = vector.load %arg2[%c0_1, %c0_2] : memref<256x32xbf16, #tpu.memory_space<vmem>>, vector<256x32xbf16>
    %cst = arith.constant dense<0.000000e+00> : vector<256x128xf32>
    %3 = tpu.matmul %2, %1, %cst {dimension_numbers = #tpu.dot_dimension_numbers<[1], [1], [0], [0], [0, 0, 1, 0], [], []>} : vector<256x32xbf16>, vector<128x32xbf16>, vector<256x128xf32> -> vector<256x128xf32>
    %c0_3 = arith.constant 0 : index
    %c0_4 = arith.constant 0 : index
    %4 = vector.load %arg3[%c0_3, %c0_4] : memref<256x1xf32, #tpu.memory_space<vmem>>, vector<256x1xf32>
    %5 = vector.broadcast %4 : vector<256x1xf32> to vector<256x128xf32>
    %6 = arith.addf %3, %5 : vector<256x128xf32>
    %cst_5 = arith.constant 0.000000e+00 : f32
    %7 = vector.broadcast %cst_5 : f32 to vector<256x128xf32>
    %8 = arith.maximumf %6, %7 : vector<256x128xf32>
    %c0_6 = arith.constant 0 : index
    %c0_7 = arith.constant 0 : index
    %9 = vector.load %arg4[%c0_6, %c0_7] : memref<256x256xbf16, #tpu.memory_space<vmem>>, vector<256x256xbf16>
    %10 = arith.truncf %8 : vector<256x128xf32> to vector<256x128xbf16>
    %cst_8 = arith.constant dense<0.000000e+00> : vector<256x128xf32>
    %11 = tpu.matmul %9, %10, %cst_8 {dimension_numbers = #tpu.dot_dimension_numbers<[1], [0], [0], [1], [0, 0, 1, 1], [], []>} : vector<256x256xbf16>, vector<256x128xbf16>, vector<256x128xf32> -> vector<256x128xf32>
    %c0_9 = arith.constant 0 : index
    %c0_10 = arith.constant 0 : index
    %12 = vector.load %arg5[%c0_9, %c0_10] : memref<256x1xf32, #tpu.memory_space<vmem>>, vector<256x1xf32>
    %13 = vector.broadcast %12 : vector<256x1xf32> to vector<256x128xf32>
    %14 = arith.addf %11, %13 : vector<256x128xf32>
    %cst_11 = arith.constant 0.000000e+00 : f32
    %15 = vector.broadcast %cst_11 : f32 to vector<256x128xf32>
    %16 = arith.maximumf %14, %15 : vector<256x128xf32>
    %c0_12 = arith.constant 0 : index
    %c0_13 = arith.constant 0 : index
    %17 = vector.load %arg6[%c0_12, %c0_13] : memref<256x256xbf16, #tpu.memory_space<vmem>>, vector<256x256xbf16>
    %18 = arith.truncf %16 : vector<256x128xf32> to vector<256x128xbf16>
    %cst_14 = arith.constant dense<0.000000e+00> : vector<256x128xf32>
    %19 = tpu.matmul %17, %18, %cst_14 {dimension_numbers = #tpu.dot_dimension_numbers<[1], [0], [0], [1], [0, 0, 1, 1], [], []>} : vector<256x256xbf16>, vector<256x128xbf16>, vector<256x128xf32> -> vector<256x128xf32>
    %c0_15 = arith.constant 0 : index
    %c0_16 = arith.constant 0 : index
    %20 = vector.load %arg7[%c0_15, %c0_16] : memref<256x1xf32, #tpu.memory_space<vmem>>, vector<256x1xf32>
    %21 = vector.broadcast %20 : vector<256x1xf32> to vector<256x128xf32>
    %22 = arith.addf %19, %21 : vector<256x128xf32>
    %cst_17 = arith.constant 0.000000e+00 : f32
    %23 = vector.broadcast %cst_17 : f32 to vector<256x128xf32>
    %24 = arith.maximumf %22, %23 : vector<256x128xf32>
    %c0_18 = arith.constant 0 : index
    %c0_19 = arith.constant 0 : index
    %25 = vector.load %arg8[%c0_18, %c0_19] : memref<256x1xf32, #tpu.memory_space<vmem>>, vector<256x1xf32>
    %26 = vector.broadcast %25 : vector<256x1xf32> to vector<256x128xf32>
    %27 = arith.mulf %24, %26 : vector<256x128xf32>
    %cst_20 = arith.constant dense<0.000000e+00> : vector<128xf32>
    %28 = vector.multi_reduction <add>, %27, %cst_20 [0] : vector<256x128xf32> to vector<128xf32>
    %29 = vector.shape_cast %28 : vector<128xf32> to vector<1x128xf32>
    %c0_21 = arith.constant 0 : index
    %30 = memref.load %arg9[%c0_21] : memref<1xf32, #tpu.memory_space<smem>>
    %31 = vector.broadcast %30 : f32 to vector<1x128xf32>
    %32 = arith.addf %29, %31 : vector<1x128xf32>
    %c0_22 = arith.constant 0 : index
    %c0_23 = arith.constant 0 : index
    %33 = vector.load %arg10[%c0_22, %c0_23] : memref<1x128xf32, #tpu.memory_space<vmem>>, vector<1x128xf32>
    tpu.vector_store %arg10[%c0_22, %c0_23], %32 {strides = array<i32>} : memref<1x128xf32, #tpu.memory_space<vmem>>, vector<1x128xf32>,
    return
  }
  func.func @transform_0(%arg0: i32) -> (i32, i32) {
    %c0_i32 = arith.constant 0 : i32
    %c0_i32_0 = arith.constant 0 : i32
    return %arg0, %c0_i32 : i32, i32
  }
  func.func @transform_1(%arg0: i32) -> (i32, i32) {
    %c0_i32 = arith.constant 0 : i32
    %c0_i32_0 = arith.constant 0 : i32
    %c0_i32_1 = arith.constant 0 : i32
    return %c0_i32, %c0_i32_0 : i32, i32
  }
  func.func @transform_2(%arg0: i32) -> (i32, i32) {
    %c0_i32 = arith.constant 0 : i32
    %c0_i32_0 = arith.constant 0 : i32
    %c0_i32_1 = arith.constant 0 : i32
    return %c0_i32, %c0_i32_0 : i32, i32
  }
  func.func @transform_3(%arg0: i32) -> (i32, i32) {
    %c0_i32 = arith.constant 0 : i32
    %c0_i32_0 = arith.constant 0 : i32
    %c0_i32_1 = arith.constant 0 : i32
    return %c0_i32, %c0_i32_0 : i32, i32
  }
  func.func @transform_4(%arg0: i32) -> (i32, i32) {
    %c0_i32 = arith.constant 0 : i32
    %c0_i32_0 = arith.constant 0 : i32
    %c0_i32_1 = arith.constant 0 : i32
    return %c0_i32, %c0_i32_0 : i32, i32
  }
  func.func @transform_5(%arg0: i32) -> (i32, i32) {
    %c0_i32 = arith.constant 0 : i32
    %c0_i32_0 = arith.constant 0 : i32
    %c0_i32_1 = arith.constant 0 : i32
    return %c0_i32, %c0_i32_0 : i32, i32
  }
  func.func @transform_6(%arg0: i32) -> (i32, i32) {
    %c0_i32 = arith.constant 0 : i32
    %c0_i32_0 = arith.constant 0 : i32
    %c0_i32_1 = arith.constant 0 : i32
    return %c0_i32, %c0_i32_0 : i32, i32
  }
  func.func @transform_7(%arg0: i32) -> (i32, i32) {
    %c0_i32 = arith.constant 0 : i32
    %c0_i32_0 = arith.constant 0 : i32
    %c0_i32_1 = arith.constant 0 : i32
    return %c0_i32, %c0_i32_0 : i32, i32
  }
  func.func @transform_8(%arg0: i32) -> i32 {
    %c0_i32 = arith.constant 0 : i32
    %c0_i32_0 = arith.constant 0 : i32
    return %c0_i32 : i32
  }
  func.func @transform_9(%arg0: i32) -> (i32, i32) {
    %c0_i32 = arith.constant 0 : i32
    %c0_i32_0 = arith.constant 0 : i32
    return %c0_i32, %arg0 : i32, i32
  }
}

</mosaic_0001>

<llo_original>
// kernel: tpu_custom_call.1
$region0: #{tpu_custom_call.1}
  #allocation0 [shape = 'u32[]', space=smem, size = 0x4, offset = 0x4, fixed_abs, tag = 'smem constant byte address 0x4 - core index']
  #allocation1 [shape = 'u32[72,128]{1,0:T(1,128)}', space=vmem, size = 0x9000, scoped, tag = 'internal scratch']
  #allocation2 [shape = 'f32[1]{0:T(128)S(6)}', space=smem, size = 0x200, scoped, tag = 'scoped memory for tpu_custom_call.1']
  %s0 = inlined_call_operand.vmem [shape: f32[128,32], index: 0, kind: input, shape index: {}]
  %s1 = inlined_call_operand.vmem [shape: bf16[256,32], index: 1, kind: input, shape index: {}]
  %s2 = inlined_call_operand.vmem [shape: f32[256,1], index: 2, kind: input, shape index: {}]
  %s3 = inlined_call_operand.vmem [shape: bf16[256,256], index: 3, kind: input, shape index: {}]
  %s4 = inlined_call_operand.vmem [shape: f32[256,1], index: 4, kind: input, shape index: {}]
  %s5 = inlined_call_operand.vmem [shape: bf16[256,256], index: 5, kind: input, shape index: {}]
  %s6 = inlined_call_operand.vmem [shape: f32[256,1], index: 6, kind: input, shape index: {}]
  %s7 = inlined_call_operand.vmem [shape: f32[256,1], index: 7, kind: input, shape index: {}]
  %s8 = inlined_call_operand.<no memory space> [shape: f32[1], index: 8, kind: input, shape index: {}]
  %s9 = inlined_call_operand.hbm [shape: f32[1,128], index: 9, kind: output, shape index: {}]
  %s10 = sld [smem:[#allocation0]]
  $region46: #{tpu_custom_call.1} parent=0
    _
  %s12 = ssub.s32 1, %s10
  %s13 = scalar_select 0, %s12, %s10
  %14 = sst [smem:[#allocation2]] %s8
  $region1: #{tpu_custom_call.1} parent=0
    #allocation3 [shape = 'u8[512]{0}', space=vmem, size = 0x400, scoped, tag = 'output window, operand 0, single buffered']
    #allocation4 [shape = 's32[1]{0}', space=sflag, size = 0x4, scoped, tag = 'scoped memory for tpu_custom_call.1']
    %15 = vsyncpa [#allocation4], 0
    // Predicated region
    $region2: #{tpu_custom_call.1} parent=1 // pred_check
      _
    $region3: #{tpu_custom_call.1} parent=1 // pred_check_branch
      %17 = sbr.rel (0) target = $region5
    $region4: #{tpu_custom_call.1} parent=1 // pred_region
      _
    $region5: #{tpu_custom_call.1} parent=1 // pred_fallthru
      _
    // Predicated region
    $region6: #{tpu_custom_call.1} parent=1 // pred_check
      _
    $region7: #{tpu_custom_call.1} parent=1 // pred_check_branch
      %19 = sbr.rel (0) target = $region9
    $region8: #{tpu_custom_call.1} parent=1 // pred_region
      _
    $region9: #{tpu_custom_call.1} parent=1 // pred_fallthru
      _
    // Predicated region
    $region10: #{tpu_custom_call.1} parent=1 // pred_check
      _
    $region11: #{tpu_custom_call.1} parent=1 // pred_check_branch
      %21 = sbr.rel (0) target = $region13
    $region12: #{tpu_custom_call.1} parent=1 // pred_region
      _
    $region13: #{tpu_custom_call.1} parent=1 // pred_fallthru
      _
    // Predicated region
    $region14: #{tpu_custom_call.1} parent=1 // pred_check
      _
    $region15: #{tpu_custom_call.1} parent=1 // pred_check_branch
      %23 = sbr.rel (0) target = $region17
    $region16: #{tpu_custom_call.1} parent=1 // pred_region
      _
    $region17: #{tpu_custom_call.1} parent=1 // pred_fallthru
      _
    // Predicated region
    $region18: #{tpu_custom_call.1} parent=1 // pred_check
      _
    $region19: #{tpu_custom_call.1} parent=1 // pred_check_branch
      %25 = sbr.rel (0) target = $region21
    $region20: #{tpu_custom_call.1} parent=1 // pred_region
      _
    $region21: #{tpu_custom_call.1} parent=1 // pred_fallthru
      _
    // Predicated region
    $region22: #{tpu_custom_call.1} parent=1 // pred_check
      _
    $region23: #{tpu_custom_call.1} parent=1 // pred_check_branch
      %27 = sbr.rel (0) target = $region25
    $region24: #{tpu_custom_call.1} parent=1 // pred_region
      _
    $region25: #{tpu_custom_call.1} parent=1 // pred_fallthru
      _
    // Predicated region
    $region26: #{tpu_custom_call.1} parent=1 // pred_check
      _
    $region27: #{tpu_custom_call.1} parent=1 // pred_check_branch
      %29 = sbr.rel (0) target = $region29
    $region28: #{tpu_custom_call.1} parent=1 // pred_region
      _
    $region29: #{tpu_custom_call.1} parent=1 // pred_fallthru
      _
    // Predicated region
    $region30: #{tpu_custom_call.1} parent=1 // pred_check
      _
    $region31: #{tpu_custom_call.1} parent=1 // pred_check_branch
      %31 = sbr.rel (0) target = $region33
    $region32: #{tpu_custom_call.1} parent=1 // pred_region
      _
    $region33: #{tpu_custom_call.1} parent=1 // pred_fallthru
      _
    // Predicated region
    $region34: #{tpu_custom_call.1} parent=1 // pred_check
      _
    $region35: #{tpu_custom_call.1} parent=1 // pred_check_branch
      %33 = sbr.rel (0) target = $region37
    $region36: #{tpu_custom_call.1} parent=1 // pred_region
      _
    $region37: #{tpu_custom_call.1} parent=1 // pred_fallthru
      _
    %v34 = vld [vmem:[%s0] sm:$0xff]
    %v35 = vld [vmem:[%s0 + $0x8] sm:$0xff]
    %v36 = vld [vmem:[%s0 + $0x10] sm:$0xff]
    %v37 = vld [vmem:[%s0 + $0x18] sm:$0xff]
    %v38 = vld [vmem:[%s0 + $0x20] sm:$0xff]
    %v39 = vld [vmem:[%s0 + $0x28] sm:$0xff]
    %v40 = vld [vmem:[%s0 + $0x30] sm:$0xff]
    %v41 = vld [vmem:[%s0 + $0x38] sm:$0xff]
    %v42 = vld [vmem:[%s0 + $0x40] sm:$0xff]
    %v43 = vld [vmem:[%s0 + $0x48] sm:$0xff]
    %v44 = vld [vmem:[%s0 + $0x50] sm:$0xff]
    %v45 = vld [vmem:[%s0 + $0x58] sm:$0xff]
    %v46 = vld [vmem:[%s0 + $0x60] sm:$0xff]
    %v47 = vld [vmem:[%s0 + $0x68] sm:$0xff]
    %v48 = vld [vmem:[%s0 + $0x70] sm:$0xff]
    %v49 = vld [vmem:[%s0 + $0x78] sm:$0xff]
    %v50 = vpack.c.bf16 %v35, %v34
    %v51 = vpack.c.bf16 %v37, %v36
    %v52 = vpack.c.bf16 %v39, %v38
    %v53 = vpack.c.bf16 %v41, %v40
    %v54 = vpack.c.bf16 %v43, %v42
    %v55 = vpack.c.bf16 %v45, %v44
    %v56 = vpack.c.bf16 %v47, %v46
    %v57 = vpack.c.bf16 %v49, %v48
    %v58 = vld [vmem:[%s1] sm:$0xf]
    %v59 = vld [vmem:[%s1 + $0x4] sm:$0xf]
    %v60 = vld [vmem:[%s1 + $0x8] sm:$0xf]
    %v61 = vld [vmem:[%s1 + $0xc] sm:$0xf]
    %v62 = vld [vmem:[%s1 + $0x10] sm:$0xf]
    %v63 = vld [vmem:[%s1 + $0x14] sm:$0xf]
    %v64 = vld [vmem:[%s1 + $0x18] sm:$0xf]
    %v65 = vld [vmem:[%s1 + $0x1c] sm:$0xf]
    %v66 = vld [vmem:[%s1 + $0x20] sm:$0xf]
    %v67 = vld [vmem:[%s1 + $0x24] sm:$0xf]
    %v68 = vld [vmem:[%s1 + $0x28] sm:$0xf]
    %v69 = vld [vmem:[%s1 + $0x2c] sm:$0xf]
    %v70 = vld [vmem:[%s1 + $0x30] sm:$0xf]
    %v71 = vld [vmem:[%s1 + $0x34] sm:$0xf]
    %v72 = vld [vmem:[%s1 + $0x38] sm:$0xf]
    %v73 = vld [vmem:[%s1 + $0x3c] sm:$0xf]
    %v74 = vld [vmem:[%s1 + $0x40] sm:$0xf]
    %v75 = vld [vmem:[%s1 + $0x44] sm:$0xf]
    %v76 = vld [vmem:[%s1 + $0x48] sm:$0xf]
    %v77 = vld [vmem:[%s1 + $0x4c] sm:$0xf]
    %v78 = vld [vmem:[%s1 + $0x50] sm:$0xf]
    %v79 = vld [vmem:[%s1 + $0x54] sm:$0xf]
    %v80 = vld [vmem:[%s1 + $0x58] sm:$0xf]
    %v81 = vld [vmem:[%s1 + $0x5c] sm:$0xf]
    %v82 = vld [vmem:[%s1 + $0x60] sm:$0xf]
    %v83 = vld [vmem:[%s1 + $0x64] sm:$0xf]
    %v84 = vld [vmem:[%s1 + $0x68] sm:$0xf]
    %v85 = vld [vmem:[%s1 + $0x6c] sm:$0xf]
    %v86 = vld [vmem:[%s1 + $0x70] sm:$0xf]
    %v87 = vld [vmem:[%s1 + $0x74] sm:$0xf]
    %v88 = vld [vmem:[%s1 + $0x78] sm:$0xf]
    %v89 = vld [vmem:[%s1 + $0x7c] sm:$0xf]
    %v90 = vld [vmem:[%s2] sm:$0xff]
    %v91 = vld [vmem:[%s2 + $0x8] sm:$0xff]
    %v92 = vld [vmem:[%s2 + $0x10] sm:$0xff]
    %v93 = vld [vmem:[%s2 + $0x18] sm:$0xff]
    %v94 = vld [vmem:[%s2 + $0x20] sm:$0xff]
    %v95 = vld [vmem:[%s2 + $0x28] sm:$0xff]
    %v96 = vld [vmem:[%s2 + $0x30] sm:$0xff]
    %v97 = vld [vmem:[%s2 + $0x38] sm:$0xff]
    %v98 = vld [vmem:[%s2 + $0x40] sm:$0xff]
    %v99 = vld [vmem:[%s2 + $0x48] sm:$0xff]
    %v100 = vld [vmem:[%s2 + $0x50] sm:$0xff]
    %v101 = vld [vmem:[%s2 + $0x58] sm:$0xff]
    %v102 = vld [vmem:[%s2 + $0x60] sm:$0xff]
    %v103 = vld [vmem:[%s2 + $0x68] sm:$0xff]
    %v104 = vld [vmem:[%s2 + $0x70] sm:$0xff]
    %v105 = vld [vmem:[%s2 + $0x78] sm:$0xff]
    %v106 = vld [vmem:[%s2 + $0x80] sm:$0xff]
    %v107 = vld [vmem:[%s2 + $0x88] sm:$0xff]
    %v108 = vld [vmem:[%s2 + $0x90] sm:$0xff]
    %v109 = vld [vmem:[%s2 + $0x98] sm:$0xff]
    %v110 = vld [vmem:[%s2 + $0xa0] sm:$0xff]
    %v111 = vld [vmem:[%s2 + $0xa8] sm:$0xff]
    %v112 = vld [vmem:[%s2 + $0xb0] sm:$0xff]
    %v113 = vld [vmem:[%s2 + $0xb8] sm:$0xff]
    %v114 = vld [vmem:[%s2 + $0xc0] sm:$0xff]
    %v115 = vld [vmem:[%s2 + $0xc8] sm:$0xff]
    %v116 = vld [vmem:[%s2 + $0xd0] sm:$0xff]
    %v117 = vld [vmem:[%s2 + $0xd8] sm:$0xff]
    %v118 = vld [vmem:[%s2 + $0xe0] sm:$0xff]
    %v119 = vld [vmem:[%s2 + $0xe8] sm:$0xff]
    %v120 = vld [vmem:[%s2 + $0xf0] sm:$0xff]
    %v121 = vld [vmem:[%s2 + $0xf8] sm:$0xff]
    %123 = vset.pattern.permute.xlu0 0
    %124 = vperm.xlu0 %123, %v90
    %v125 = vpop.permute.xlu0 %124
    %128 = vset.pattern.permute.xlu0 0
    %129 = vperm.xlu0 %128, %v91
    %v130 = vpop.permute.xlu0 %129
    %133 = vset.pattern.permute.xlu0 0
    %134 = vperm.xlu0 %133, %v92
    %v135 = vpop.permute.xlu0 %134
    %138 = vset.pattern.permute.xlu0 0
    %139 = vperm.xlu0 %138, %v93
    %v140 = vpop.permute.xlu0 %139
    %143 = vset.pattern.permute.xlu0 0
    %144 = vperm.xlu0 %143, %v94
    %v145 = vpop.permute.xlu0 %144
    %148 = vset.pattern.permute.xlu0 0
    %149 = vperm.xlu0 %148, %v95
    %v150 = vpop.permute.xlu0 %149
    %153 = vset.pattern.permute.xlu0 0
    %154 = vperm.xlu0 %153, %v96
    %v155 = vpop.permute.xlu0 %154
    %158 = vset.pattern.permute.xlu0 0
    %159 = vperm.xlu0 %158, %v97
    %v160 = vpop.permute.xlu0 %159
    %163 = vset.pattern.permute.xlu0 0
    %164 = vperm.xlu0 %163, %v98
    %v165 = vpop.permute.xlu0 %164
    %168 = vset.pattern.permute.xlu0 0
    %169 = vperm.xlu0 %168, %v99
    %v170 = vpop.permute.xlu0 %169
    %173 = vset.pattern.permute.xlu0 0
    %174 = vperm.xlu0 %173, %v100
    %v175 = vpop.permute.xlu0 %174
    %178 = vset.pattern.permute.xlu0 0
    %179 = vperm.xlu0 %178, %v101
    %v180 = vpop.permute.xlu0 %179
    %183 = vset.pattern.permute.xlu0 0
    %184 = vperm.xlu0 %183, %v102
    %v185 = vpop.permute.xlu0 %184
    %188 = vset.pattern.permute.xlu0 0
    %189 = vperm.xlu0 %188, %v103
    %v190 = vpop.permute.xlu0 %189
    %193 = vset.pattern.permute.xlu0 0
    %194 = vperm.xlu0 %193, %v104
    %v195 = vpop.permute.xlu0 %194
    %198 = vset.pattern.permute.xlu0 0
    %199 = vperm.xlu0 %198, %v105
    %v200 = vpop.permute.xlu0 %199
    %203 = vset.pattern.permute.xlu0 0
    %204 = vperm.xlu0 %203, %v106
    %v205 = vpop.permute.xlu0 %204
    %208 = vset.pattern.permute.xlu0 0
    %209 = vperm.xlu0 %208, %v107
    %v210 = vpop.permute.xlu0 %209
    %213 = vset.pattern.permute.xlu0 0
    %214 = vperm.xlu0 %213, %v108
    %v215 = vpop.permute.xlu0 %214
    %218 = vset.pattern.permute.xlu0 0
    %219 = vperm.xlu0 %218, %v109
    %v220 = vpop.permute.xlu0 %219
    %223 = vset.pattern.permute.xlu0 0
    %224 = vperm.xlu0 %223, %v110
    %v225 = vpop.permute.xlu0 %224
    %228 = vset.pattern.permute.xlu0 0
    %229 = vperm.xlu0 %228, %v111
    %v230 = vpop.permute.xlu0 %229
    %233 = vset.pattern.permute.xlu0 0
    %234 = vperm.xlu0 %233, %v112
    %v235 = vpop.permute.xlu0 %234
    %238 = vset.pattern.permute.xlu0 0
    %239 = vperm.xlu0 %238, %v113
    %v240 = vpop.permute.xlu0 %239
    %243 = vset.pattern.permute.xlu0 0
    %244 = vperm.xlu0 %243, %v114
    %v245 = vpop.permute.xlu0 %244
    %248 = vset.pattern.permute.xlu0 0
    %249 = vperm.xlu0 %248, %v115
    %v250 = vpop.permute.xlu0 %249
    %253 = vset.pattern.permute.xlu0 0
    %254 = vperm.xlu0 %253, %v116
    %v255 = vpop.permute.xlu0 %254
    %258 = vset.pattern.permute.xlu0 0
    %259 = vperm.xlu0 %258, %v117
    %v260 = vpop.permute.xlu0 %259
    %263 = vset.pattern.permute.xlu0 0
    %264 = vperm.xlu0 %263, %v118
    %v265 = vpop.permute.xlu0 %264
    %268 = vset.pattern.permute.xlu0 0
    %269 = vperm.xlu0 %268, %v119
    %v270 = vpop.permute.xlu0 %269
    %273 = vset.pattern.permute.xlu0 0
    %274 = vperm.xlu0 %273, %v120
    %v275 = vpop.permute.xlu0 %274
    %278 = vset.pattern.permute.xlu0 0
    %279 = vperm.xlu0 %278, %v121
    %v280 = vpop.permute.xlu0 %279
    %v314 = vunpack.c.l.b16 %v58
    %v315 = vunpack.c.l.b16 %v59
    %v316 = vunpack.c.l.b16 %v60
    %v317 = vunpack.c.l.b16 %v61
    %v318 = vunpack.c.l.b16 %v62
    %v319 = vunpack.c.l.b16 %v63
    %v320 = vunpack.c.l.b16 %v64
    %v321 = vunpack.c.l.b16 %v65
    %v322 = vunpack.c.l.b16 %v66
    %v323 = vunpack.c.l.b16 %v67
    %v324 = vunpack.c.l.b16 %v68
    %v325 = vunpack.c.l.b16 %v69
    %v326 = vunpack.c.l.b16 %v70
    %v327 = vunpack.c.l.b16 %v71
    %v328 = vunpack.c.l.b16 %v72
    %v329 = vunpack.c.l.b16 %v73
    %v330 = vunpack.c.l.b16 %v74
    %v331 = vunpack.c.l.b16 %v75
    %v332 = vunpack.c.l.b16 %v76
    %v333 = vunpack.c.l.b16 %v77
    %v334 = vunpack.c.l.b16 %v78
    %v335 = vunpack.c.l.b16 %v79
    %v336 = vunpack.c.l.b16 %v80
    %v337 = vunpack.c.l.b16 %v81
    %v338 = vunpack.c.l.b16 %v82
    %v339 = vunpack.c.l.b16 %v83
    %v340 = vunpack.c.l.b16 %v84
    %v341 = vunpack.c.l.b16 %v85
    %v342 = vunpack.c.l.b16 %v86
    %v343 = vunpack.c.l.b16 %v87
    %v344 = vunpack.c.l.b16 %v88
    %v345 = vunpack.c.l.b16 %v89
    %v346 = vpack.c.b16 %v315, %v314
    %v347 = vpack.c.b16 %v317, %v316
    %v348 = vpack.c.b16 %v319, %v318
    %v349 = vpack.c.b16 %v321, %v320
    %v350 = vpack.c.b16 %v323, %v322
    %v351 = vpack.c.b16 %v325, %v324
    %v352 = vpack.c.b16 %v327, %v326
    %v353 = vpack.c.b16 %v329, %v328
    %v354 = vpack.c.b16 %v331, %v330
    %v355 = vpack.c.b16 %v333, %v332
    %v356 = vpack.c.b16 %v335, %v334
    %v357 = vpack.c.b16 %v337, %v336
    %v358 = vpack.c.b16 %v339, %v338
    %v359 = vpack.c.b16 %v341, %v340
    %v360 = vpack.c.b16 %v343, %v342
    %v361 = vpack.c.b16 %v345, %v344
    %vm362 = vcmask 261120
    %v364 = vsel %vm362, %v346, 0
    %v367 = vsel %vm362, %v347, 0
    %v370 = vsel %vm362, %v348, 0
    %v373 = vsel %vm362, %v349, 0
    %v376 = vsel %vm362, %v350, 0
    %v379 = vsel %vm362, %v351, 0
    %v382 = vsel %vm362, %v352, 0
    %v385 = vsel %vm362, %v353, 0
    %v388 = vsel %vm362, %v354, 0
    %v391 = vsel %vm362, %v355, 0
    %v394 = vsel %vm362, %v356, 0
    %v397 = vsel %vm362, %v357, 0
    %v400 = vsel %vm362, %v358, 0
    %v403 = vsel %vm362, %v359, 0
    %v406 = vsel %vm362, %v360, 0
    %v409 = vsel %vm362, %v361, 0
    %v412 = vsel %vm362, %v50, 0
    %v415 = vsel %vm362, %v51, 0
    %v418 = vsel %vm362, %v52, 0
    %v421 = vsel %vm362, %v53, 0
    %v424 = vsel %vm362, %v54, 0
    %v427 = vsel %vm362, %v55, 0
    %v430 = vsel %vm362, %v56, 0
    %v433 = vsel %vm362, %v57, 0
    %435 = vmatpush.bf16.xpose.msra.mxu0 %v433
    %436 = vmatpush.bf16.xpose.msra.mxu0 %v430
    %437 = vmatpush.bf16.xpose.msra.mxu0 %v427
    %438 = vmatpush.bf16.xpose.msra.mxu0 %v424
    %439 = vmatpush.bf16.xpose.msra.mxu0 %v421
    %440 = vmatpush.bf16.xpose.msra.mxu0 %v418
    %441 = vmatpush.bf16.xpose.msra.mxu0 %v415
    %442 = vmatpush.bf16.xpose.msra.mxu0 %v412
    %443 = vmatmul.bf16.gmra.mxu0 %v364
    %v444 = vpop.f32.mrf.mxu0
    %v445 = vadd.f32 %v125, %v444
    %v446 = vpop.f32.mrf.mxu0
    %v447 = vadd.f32 %v130, %v446
    %448 = vmatmul.bf16.gmra.mxu0 %v367
    %v449 = vpop.f32.mrf.mxu0
    %v450 = vadd.f32 %v135, %v449
    %v451 = vpop.f32.mrf.mxu0
    %v452 = vadd.f32 %v140, %v451
    %453 = vmatmul.bf16.gmra.mxu0 %v370
    %v454 = vpop.f32.mrf.mxu0
    %v455 = vadd.f32 %v145, %v454
    %v456 = vpop.f32.mrf.mxu0
    %v457 = vadd.f32 %v150, %v456
    %458 = vmatmul.bf16.gmra.mxu0 %v373
    %v459 = vpop.f32.mrf.mxu0
    %v460 = vadd.f32 %v155, %v459
    %v461 = vpop.f32.mrf.mxu0
    %v462 = vadd.f32 %v160, %v461
    %463 = vmatmul.bf16.gmra.mxu0 %v376
    %v464 = vpop.f32.mrf.mxu0
    %v465 = vadd.f32 %v165, %v464
    %v466 = vpop.f32.mrf.mxu0
    %v467 = vadd.f32 %v170, %v466
    %468 = vmatmul.bf16.gmra.mxu0 %v379
    %v469 = vpop.f32.mrf.mxu0
    %v470 = vadd.f32 %v175, %v469
    %v471 = vpop.f32.mrf.mxu0
    %v472 = vadd.f32 %v180, %v471
    %473 = vmatmul.bf16.gmra.mxu0 %v382
    %v474 = vpop.f32.mrf.mxu0
    %v475 = vadd.f32 %v185, %v474
    %v476 = vpop.f32.mrf.mxu0
    %v477 = vadd.f32 %v190, %v476
    %478 = vmatmul.bf16.gmra.mxu0 %v385
    %v479 = vpop.f32.mrf.mxu0
    %v480 = vadd.f32 %v195, %v479
    %v481 = vpop.f32.mrf.mxu0
    %v482 = vadd.f32 %v200, %v481
    %483 = vmatmul.bf16.gmra.mxu0 %v388
    %v484 = vpop.f32.mrf.mxu0
    %v485 = vadd.f32 %v205, %v484
    %v486 = vpop.f32.mrf.mxu0
    %v487 = vadd.f32 %v210, %v486
    %488 = vmatmul.bf16.gmra.mxu0 %v391
    %v489 = vpop.f32.mrf.mxu0
    %v490 = vadd.f32 %v215, %v489
    %v491 = vpop.f32.mrf.mxu0
    %v492 = vadd.f32 %v220, %v491
    %493 = vmatmul.bf16.gmra.mxu0 %v394
    %v494 = vpop.f32.mrf.mxu0
    %v495 = vadd.f32 %v225, %v494
    %v496 = vpop.f32.mrf.mxu0
    %v497 = vadd.f32 %v230, %v496
    %498 = vmatmul.bf16.gmra.mxu0 %v397
    %v499 = vpop.f32.mrf.mxu0
    %v500 = vadd.f32 %v235, %v499
    %v501 = vpop.f32.mrf.mxu0
    %v502 = vadd.f32 %v240, %v501
    %503 = vmatmul.bf16.gmra.mxu0 %v400
    %v504 = vpop.f32.mrf.mxu0
    %v505 = vadd.f32 %v245, %v504
    %v506 = vpop.f32.mrf.mxu0
    %v507 = vadd.f32 %v250, %v506
    %508 = vmatmul.bf16.gmra.mxu0 %v403
    %v509 = vpop.f32.mrf.mxu0
    %v510 = vadd.f32 %v255, %v509
    %v511 = vpop.f32.mrf.mxu0
    %v512 = vadd.f32 %v260, %v511
    %513 = vmatmul.bf16.gmra.mxu0 %v406
    %v514 = vpop.f32.mrf.mxu0
    %v515 = vadd.f32 %v265, %v514
    %v516 = vpop.f32.mrf.mxu0
    %v517 = vadd.f32 %v270, %v516
    %518 = vmatmul.bf16.gmra.mxu0 %v409
    %v519 = vpop.f32.mrf.mxu0
    %v520 = vadd.f32 %v275, %v519
    %v521 = vpop.f32.mrf.mxu0
    %v522 = vadd.f32 %v280, %v521
    %523 = vdwg.mxu0
    %v524 = vmax.f32 %v445, 0.0
    %v525 = vmax.f32 %v447, 0.0
    %v526 = vmax.f32 %v450, 0.0
    %v527 = vmax.f32 %v452, 0.0
    %v528 = vmax.f32 %v455, 0.0
    %v529 = vmax.f32 %v457, 0.0
    %v530 = vmax.f32 %v460, 0.0
    %v531 = vmax.f32 %v462, 0.0
    %v532 = vmax.f32 %v465, 0.0
    %v533 = vmax.f32 %v467, 0.0
    %v534 = vmax.f32 %v470, 0.0
    %v535 = vmax.f32 %v472, 0.0
    %v536 = vmax.f32 %v475, 0.0
    %v537 = vmax.f32 %v477, 0.0
    %v538 = vmax.f32 %v480, 0.0
    %v539 = vmax.f32 %v482, 0.0
    %v540 = vmax.f32 %v485, 0.0
    %v541 = vmax.f32 %v487, 0.0
    %v542 = vmax.f32 %v490, 0.0
    %v543 = vmax.f32 %v492, 0.0
    %v544 = vmax.f32 %v495, 0.0
    %v545 = vmax.f32 %v497, 0.0
    %v546 = vmax.f32 %v500, 0.0
    %v547 = vmax.f32 %v502, 0.0
    %v548 = vmax.f32 %v505, 0.0
    %v549 = vmax.f32 %v507, 0.0
    %v550 = vmax.f32 %v510, 0.0
    %v551 = vmax.f32 %v512, 0.0
    %v552 = vmax.f32 %v515, 0.0
    %v553 = vmax.f32 %v517, 0.0
    %v554 = vmax.f32 %v520, 0.0
    %v555 = vmax.f32 %v522, 0.0
    %v556 = vld [vmem:[%s3] sm:$0xff]
    %v557 = vld [vmem:[%s3 + $0x8] sm:$0xff]
    %v558 = vld [vmem:[%s3 + $0x10] sm:$0xff]
    %v559 = vld [vmem:[%s3 + $0x18] sm:$0xff]
    %v560 = vld [vmem:[%s3 + $0x20] sm:$0xff]
    %v561 = vld [vmem:[%s3 + $0x28] sm:$0xff]
    %v562 = vld [vmem:[%s3 + $0x30] sm:$0xff]
    %v563 = vld [vmem:[%s3 + $0x38] sm:$0xff]
    %v564 = vld [vmem:[%s3 + $0x40] sm:$0xff]
    %v565 = vld [vmem:[%s3 + $0x48] sm:$0xff]
    %v566 = vld [vmem:[%s3 + $0x50] sm:$0xff]
    %v567 = vld [vmem:[%s3 + $0x58] sm:$0xff]
    %v568 = vld [vmem:[%s3 + $0x60] sm:$0xff]
    %v569 = vld [vmem:[%s3 + $0x68] sm:$0xff]
    %v570 = vld [vmem:[%s3 + $0x70] sm:$0xff]
    %v571 = vld [vmem:[%s3 + $0x78] sm:$0xff]
    %v572 = vld [vmem:[%s3 + $0x80] sm:$0xff]
    %v573 = vld [vmem:[%s3 + $0x88] sm:$0xff]
    %v574 = vld [vmem:[%s3 + $0x90] sm:$0xff]
    %v575 = vld [vmem:[%s3 + $0x98] sm:$0xff]
    %v576 = vld [vmem:[%s3 + $0xa0] sm:$0xff]
    %v577 = vld [vmem:[%s3 + $0xa8] sm:$0xff]
    %v578 = vld [vmem:[%s3 + $0xb0] sm:$0xff]
    %v579 = vld [vmem:[%s3 + $0xb8] sm:$0xff]
    %v580 = vld [vmem:[%s3 + $0xc0] sm:$0xff]
    %v581 = vld [vmem:[%s3 + $0xc8] sm:$0xff]
    %v582 = vld [vmem:[%s3 + $0xd0] sm:$0xff]
    %v583 = vld [vmem:[%s3 + $0xd8] sm:$0xff]
    %v584 = vld [vmem:[%s3 + $0xe0] sm:$0xff]
    %v585 = vld [vmem:[%s3 + $0xe8] sm:$0xff]
    %v586 = vld [vmem:[%s3 + $0xf0] sm:$0xff]
    %v587 = vld [vmem:[%s3 + $0xf8] sm:$0xff]
    %v588 = vpack.c.bf16 %v525, %v524
    %v589 = vpack.c.bf16 %v527, %v526
    %v590 = vpack.c.bf16 %v529, %v528
    %v591 = vpack.c.bf16 %v531, %v530
    %v592 = vpack.c.bf16 %v533, %v532
    %v593 = vpack.c.bf16 %v535, %v534
    %v594 = vpack.c.bf16 %v537, %v536
    %v595 = vpack.c.bf16 %v539, %v538
    %v596 = vpack.c.bf16 %v541, %v540
    %v597 = vpack.c.bf16 %v543, %v542
    %v598 = vpack.c.bf16 %v545, %v544
    %v599 = vpack.c.bf16 %v547, %v546
    %v600 = vpack.c.bf16 %v549, %v548
    %v601 = vpack.c.bf16 %v551, %v550
    %v602 = vpack.c.bf16 %v553, %v552
    %v603 = vpack.c.bf16 %v555, %v554
    %v604 = vld [vmem:[%s4] sm:$0xff]
    %v605 = vld [vmem:[%s4 + $0x8] sm:$0xff]
    %v606 = vld [vmem:[%s4 + $0x10] sm:$0xff]
    %v607 = vld [vmem:[%s4 + $0x18] sm:$0xff]
    %v608 = vld [vmem:[%s4 + $0x20] sm:$0xff]
    %v609 = vld [vmem:[%s4 + $0x28] sm:$0xff]
    %v610 = vld [vmem:[%s4 + $0x30] sm:$0xff]
    %v611 = vld [vmem:[%s4 + $0x38] sm:$0xff]
    %v612 = vld [vmem:[%s4 + $0x40] sm:$0xff]
    %v613 = vld [vmem:[%s4 + $0x48] sm:$0xff]
    %v614 = vld [vmem:[%s4 + $0x50] sm:$0xff]
    %v615 = vld [vmem:[%s4 + $0x58] sm:$0xff]
    %v616 = vld [vmem:[%s4 + $0x60] sm:$0xff]
    %v617 = vld [vmem:[%s4 + $0x68] sm:$0xff]
    %v618 = vld [vmem:[%s4 + $0x70] sm:$0xff]
    %v619 = vld [vmem:[%s4 + $0x78] sm:$0xff]
    %v620 = vld [vmem:[%s4 + $0x80] sm:$0xff]
    %v621 = vld [vmem:[%s4 + $0x88] sm:$0xff]
    %v622 = vld [vmem:[%s4 + $0x90] sm:$0xff]
    %v623 = vld [vmem:[%s4 + $0x98] sm:$0xff]
    %v624 = vld [vmem:[%s4 + $0xa0] sm:$0xff]
    %v625 = vld [vmem:[%s4 + $0xa8] sm:$0xff]
    %v626 = vld [vmem:[%s4 + $0xb0] sm:$0xff]
    %v627 = vld [vmem:[%s4 + $0xb8] sm:$0xff]
    %v628 = vld [vmem:[%s4 + $0xc0] sm:$0xff]
    %v629 = vld [vmem:[%s4 + $0xc8] sm:$0xff]
    %v630 = vld [vmem:[%s4 + $0xd0] sm:$0xff]
    %v631 = vld [vmem:[%s4 + $0xd8] sm:$0xff]
    %v632 = vld [vmem:[%s4 + $0xe0] sm:$0xff]
    %v633 = vld [vmem:[%s4 + $0xe8] sm:$0xff]
    %v634 = vld [vmem:[%s4 + $0xf0] sm:$0xff]
    %v635 = vld [vmem:[%s4 + $0xf8] sm:$0xff]
    %637 = vset.pattern.permute.xlu0 0
    %638 = vperm.xlu0 %637, %v604
    %v639 = vpop.permute.xlu0 %638
    %642 = vset.pattern.permute.xlu0 0
    %643 = vperm.xlu0 %642, %v605
    %v644 = vpop.permute.xlu0 %643
    %647 = vset.pattern.permute.xlu0 0
    %648 = vperm.xlu0 %647, %v606
    %v649 = vpop.permute.xlu0 %648
    %652 = vset.pattern.permute.xlu0 0
    %653 = vperm.xlu0 %652, %v607
    %v654 = vpop.permute.xlu0 %653
    %657 = vset.pattern.permute.xlu0 0
    %658 = vperm.xlu0 %657, %v608
    %v659 = vpop.permute.xlu0 %658
    %662 = vset.pattern.permute.xlu0 0
    %663 = vperm.xlu0 %662, %v609
    %v664 = vpop.permute.xlu0 %663
    %667 = vset.pattern.permute.xlu0 0
    %668 = vperm.xlu0 %667, %v610
    %v669 = vpop.permute.xlu0 %668
    %672 = vset.pattern.permute.xlu0 0
    %673 = vperm.xlu0 %672, %v611
    %v674 = vpop.permute.xlu0 %673
    %677 = vset.pattern.permute.xlu0 0
    %678 = vperm.xlu0 %677, %v612
    %v679 = vpop.permute.xlu0 %678
    %682 = vset.pattern.permute.xlu0 0
    %683 = vperm.xlu0 %682, %v613
    %v684 = vpop.permute.xlu0 %683
    %687 = vset.pattern.permute.xlu0 0
    %688 = vperm.xlu0 %687, %v614
    %v689 = vpop.permute.xlu0 %688
    %692 = vset.pattern.permute.xlu0 0
    %693 = vperm.xlu0 %692, %v615
    %v694 = vpop.permute.xlu0 %693
    %697 = vset.pattern.permute.xlu0 0
    %698 = vperm.xlu0 %697, %v616
    %v699 = vpop.permute.xlu0 %698
    %702 = vset.pattern.permute.xlu0 0
    %703 = vperm.xlu0 %702, %v617
    %v704 = vpop.permute.xlu0 %703
    %707 = vset.pattern.permute.xlu0 0
    %708 = vperm.xlu0 %707, %v618
    %v709 = vpop.permute.xlu0 %708
    %712 = vset.pattern.permute.xlu0 0
    %713 = vperm.xlu0 %712, %v619
    %v714 = vpop.permute.xlu0 %713
    %717 = vset.pattern.permute.xlu0 0
    %718 = vperm.xlu0 %717, %v620
    %v719 = vpop.permute.xlu0 %718
    %722 = vset.pattern.permute.xlu0 0
    %723 = vperm.xlu0 %722, %v621
    %v724 = vpop.permute.xlu0 %723
    %727 = vset.pattern.permute.xlu0 0
    %728 = vperm.xlu0 %727, %v622
    %v729 = vpop.permute.xlu0 %728
    %732 = vset.pattern.permute.xlu0 0
    %733 = vperm.xlu0 %732, %v623
    %v734 = vpop.permute.xlu0 %733
    %737 = vset.pattern.permute.xlu0 0
    %738 = vperm.xlu0 %737, %v624
    %v739 = vpop.permute.xlu0 %738
    %742 = vset.pattern.permute.xlu0 0
    %743 = vperm.xlu0 %742, %v625
    %v744 = vpop.permute.xlu0 %743
    %747 = vset.pattern.permute.xlu0 0
    %748 = vperm.xlu0 %747, %v626
    %v749 = vpop.permute.xlu0 %748
    %752 = vset.pattern.permute.xlu0 0
    %753 = vperm.xlu0 %752, %v627
    %v754 = vpop.permute.xlu0 %753
    %757 = vset.pattern.permute.xlu0 0
    %758 = vperm.xlu0 %757, %v628
    %v759 = vpop.permute.xlu0 %758
    %762 = vset.pattern.permute.xlu0 0
    %763 = vperm.xlu0 %762, %v629
    %v764 = vpop.permute.xlu0 %763
    %767 = vset.pattern.permute.xlu0 0
    %768 = vperm.xlu0 %767, %v630
    %v769 = vpop.permute.xlu0 %768
    %772 = vset.pattern.permute.xlu0 0
    %773 = vperm.xlu0 %772, %v631
    %v774 = vpop.permute.xlu0 %773
    %777 = vset.pattern.permute.xlu0 0
    %778 = vperm.xlu0 %777, %v632
    %v779 = vpop.permute.xlu0 %778
    %782 = vset.pattern.permute.xlu0 0
    %783 = vperm.xlu0 %782, %v633
    %v784 = vpop.permute.xlu0 %783
    %787 = vset.pattern.permute.xlu0 0
    %788 = vperm.xlu0 %787, %v634
    %v789 = vpop.permute.xlu0 %788
    %792 = vset.pattern.permute.xlu0 0
    %793 = vperm.xlu0 %792, %v635
    %v794 = vpop.permute.xlu0 %793
    %v828 = vunpack.c.l.b16 %v556
    %v829 = vunpack.c.h.b16 %v556
    %v830 = vunpack.c.l.b16 %v557
    %v831 = vunpack.c.h.b16 %v557
    %v832 = vunpack.c.l.b16 %v558
    %v833 = vunpack.c.h.b16 %v558
    %v834 = vunpack.c.l.b16 %v559
    %v835 = vunpack.c.h.b16 %v559
    %v836 = vunpack.c.l.b16 %v560
    %v837 = vunpack.c.h.b16 %v560
    %v838 = vunpack.c.l.b16 %v561
    %v839 = vunpack.c.h.b16 %v561
    %v840 = vunpack.c.l.b16 %v562
    %v841 = vunpack.c.h.b16 %v562
    %v842 = vunpack.c.l.b16 %v563
    %v843 = vunpack.c.h.b16 %v563
    %v844 = vunpack.c.l.b16 %v564
    %v845 = vunpack.c.h.b16 %v564
    %v846 = vunpack.c.l.b16 %v565
    %v847 = vunpack.c.h.b16 %v565
    %v848 = vunpack.c.l.b16 %v566
    %v849 = vunpack.c.h.b16 %v566
    %v850 = vunpack.c.l.b16 %v567
    %v851 = vunpack.c.h.b16 %v567
    %v852 = vunpack.c.l.b16 %v568
    %v853 = vunpack.c.h.b16 %v568
    %v854 = vunpack.c.l.b16 %v569
    %v855 = vunpack.c.h.b16 %v569
    %v856 = vunpack.c.l.b16 %v570
    %v857 = vunpack.c.h.b16 %v570
    %v858 = vunpack.c.l.b16 %v571
    %v859 = vunpack.c.h.b16 %v571
    %v860 = vunpack.c.l.b16 %v572
    %v861 = vunpack.c.h.b16 %v572
    %v862 = vunpack.c.l.b16 %v573
    %v863 = vunpack.c.h.b16 %v573
    %v864 = vunpack.c.l.b16 %v574
    %v865 = vunpack.c.h.b16 %v574
    %v866 = vunpack.c.l.b16 %v575
    %v867 = vunpack.c.h.b16 %v575
    %v868 = vunpack.c.l.b16 %v576
    %v869 = vunpack.c.h.b16 %v576
    %v870 = vunpack.c.l.b16 %v577
    %v871 = vunpack.c.h.b16 %v577
    %v872 = vunpack.c.l.b16 %v578
    %v873 = vunpack.c.h.b16 %v578
    %v874 = vunpack.c.l.b16 %v579
    %v875 = vunpack.c.h.b16 %v579
    %v876 = vunpack.c.l.b16 %v580
    %v877 = vunpack.c.h.b16 %v580
    %v878 = vunpack.c.l.b16 %v581
    %v879 = vunpack.c.h.b16 %v581
    %v880 = vunpack.c.l.b16 %v582
    %v881 = vunpack.c.h.b16 %v582
    %v882 = vunpack.c.l.b16 %v583
    %v883 = vunpack.c.h.b16 %v583
    %v884 = vunpack.c.l.b16 %v584
    %v885 = vunpack.c.h.b16 %v584
    %v886 = vunpack.c.l.b16 %v585
    %v887 = vunpack.c.h.b16 %v585
    %v888 = vunpack.c.l.b16 %v586
    %v889 = vunpack.c.h.b16 %v586
    %v890 = vunpack.c.l.b16 %v587
    %v891 = vunpack.c.h.b16 %v587
    %v892 = vpack.c.b16 %v830, %v828
    %v893 = vpack.c.b16 %v831, %v829
    %v894 = vpack.c.b16 %v834, %v832
    %v895 = vpack.c.b16 %v835, %v833
    %v896 = vpack.c.b16 %v838, %v836
    %v897 = vpack.c.b16 %v839, %v837
    %v898 = vpack.c.b16 %v842, %v840
    %v899 = vpack.c.b16 %v843, %v841
    %v900 = vpack.c.b16 %v846, %v844
    %v901 = vpack.c.b16 %v847, %v845
    %v902 = vpack.c.b16 %v850, %v848
    %v903 = vpack.c.b16 %v851, %v849
    %v904 = vpack.c.b16 %v854, %v852
    %v905 = vpack.c.b16 %v855, %v853
    %v906 = vpack.c.b16 %v858, %v856
    %v907 = vpack.c.b16 %v859, %v857
    %v908 = vpack.c.b16 %v862, %v860
    %v909 = vpack.c.b16 %v863, %v861
    %v910 = vpack.c.b16 %v866, %v864
    %v911 = vpack.c.b16 %v867, %v865
    %v912 = vpack.c.b16 %v870, %v868
    %v913 = vpack.c.b16 %v871, %v869
    %v914 = vpack.c.b16 %v874, %v872
    %v915 = vpack.c.b16 %v875, %v873
    %v916 = vpack.c.b16 %v878, %v876
    %v917 = vpack.c.b16 %v879, %v877
    %v918 = vpack.c.b16 %v882, %v880
    %v919 = vpack.c.b16 %v883, %v881
    %v920 = vpack.c.b16 %v886, %v884
    %v921 = vpack.c.b16 %v887, %v885
    %v922 = vpack.c.b16 %v890, %v888
    %v923 = vpack.c.b16 %v891, %v889
    %956 = vmatpush.bf16.msra.mxu0 %v595
    %957 = vmatpush.bf16.msra.mxu0 %v594
    %958 = vmatpush.bf16.msra.mxu0 %v593
    %959 = vmatpush.bf16.msra.mxu0 %v592
    %960 = vmatpush.bf16.msra.mxu0 %v591
    %961 = vmatpush.bf16.msra.mxu0 %v590
    %962 = vmatpush.bf16.msra.mxu0 %v589
    %963 = vmatpush.bf16.msra.mxu0 %v588
    %964 = vmatmul.bf16.gmra.mxu0 %v892
    %v965 = vpop.f32.mrf.mxu0
    %v966 = vadd.f32 %v639, %v965
    %v967 = vpop.f32.mrf.mxu0
    %v968 = vadd.f32 %v644, %v967
    %969 = vmatmul.bf16.gmra.mxu0 %v894
    %v970 = vpop.f32.mrf.mxu0
    %v971 = vadd.f32 %v649, %v970
    %v972 = vpop.f32.mrf.mxu0
    %v973 = vadd.f32 %v654, %v972
    %974 = vmatmul.bf16.gmra.mxu0 %v896
    %v975 = vpop.f32.mrf.mxu0
    %v976 = vadd.f32 %v659, %v975
    %v977 = vpop.f32.mrf.mxu0
    %v978 = vadd.f32 %v664, %v977
    %979 = vmatmul.bf16.gmra.mxu0 %v898
    %v980 = vpop.f32.mrf.mxu0
    %v981 = vadd.f32 %v669, %v980
    %v982 = vpop.f32.mrf.mxu0
    %v983 = vadd.f32 %v674, %v982
    %984 = vmatmul.bf16.gmra.mxu0 %v900
    %v985 = vpop.f32.mrf.mxu0
    %v986 = vadd.f32 %v679, %v985
    %v987 = vpop.f32.mrf.mxu0
    %v988 = vadd.f32 %v684, %v987
    %989 = vmatmul.bf16.gmra.mxu0 %v902
    %v990 = vpop.f32.mrf.mxu0
    %v991 = vadd.f32 %v689, %v990
    %v992 = vpop.f32.mrf.mxu0
    %v993 = vadd.f32 %v694, %v992
    %994 = vmatmul.bf16.gmra.mxu0 %v904
    %v995 = vpop.f32.mrf.mxu0
    %v996 = vadd.f32 %v699, %v995
    %v997 = vpop.f32.mrf.mxu0
    %v998 = vadd.f32 %v704, %v997
    %999 = vmatmul.bf16.gmra.mxu0 %v906
    %v1000 = vpop.f32.mrf.mxu0
    %v1001 = vadd.f32 %v709, %v1000
    %v1002 = vpop.f32.mrf.mxu0
    %v1003 = vadd.f32 %v714, %v1002
    %1004 = vmatmul.bf16.gmra.mxu0 %v908
    %v1005 = vpop.f32.mrf.mxu0
    %v1006 = vadd.f32 %v719, %v1005
    %v1007 = vpop.f32.mrf.mxu0
    %v1008 = vadd.f32 %v724, %v1007
    %1009 = vmatmul.bf16.gmra.mxu0 %v910
    %v1010 = vpop.f32.mrf.mxu0
    %v1011 = vadd.f32 %v729, %v1010
    %v1012 = vpop.f32.mrf.mxu0
    %v1013 = vadd.f32 %v734, %v1012
    %1014 = vmatmul.bf16.gmra.mxu0 %v912
    %v1015 = vpop.f32.mrf.mxu0
    %v1016 = vadd.f32 %v739, %v1015
    %v1017 = vpop.f32.mrf.mxu0
    %v1018 = vadd.f32 %v744, %v1017
    %1019 = vmatmul.bf16.gmra.mxu0 %v914
    %v1020 = vpop.f32.mrf.mxu0
    %v1021 = vadd.f32 %v749, %v1020
    %v1022 = vpop.f32.mrf.mxu0
    %v1023 = vadd.f32 %v754, %v1022
    %1024 = vmatmul.bf16.gmra.mxu0 %v916
    %v1025 = vpop.f32.mrf.mxu0
    %v1026 = vadd.f32 %v759, %v1025
    %v1027 = vpop.f32.mrf.mxu0
    %v1028 = vadd.f32 %v764, %v1027
    %1029 = vmatmul.bf16.gmra.mxu0 %v918
    %v1030 = vpop.f32.mrf.mxu0
    %v1031 = vadd.f32 %v769, %v1030
    %v1032 = vpop.f32.mrf.mxu0
    %v1033 = vadd.f32 %v774, %v1032
    %1034 = vmatmul.bf16.gmra.mxu0 %v920
    %v1035 = vpop.f32.mrf.mxu0
    %v1036 = vadd.f32 %v779, %v1035
    %v1037 = vpop.f32.mrf.mxu0
    %v1038 = vadd.f32 %v784, %v1037
    %1039 = vmatmul.bf16.gmra.mxu0 %v922
    %v1040 = vpop.f32.mrf.mxu0
    %v1041 = vadd.f32 %v789, %v1040
    %v1042 = vpop.f32.mrf.mxu0
    %v1043 = vadd.f32 %v794, %v1042
    %1044 = vdwg.mxu0
    %1045 = vmatpush.bf16.msra.mxu0 %v603
    %1046 = vmatpush.bf16.msra.mxu0 %v602
    %1047 = vmatpush.bf16.msra.mxu0 %v601
    %1048 = vmatpush.bf16.msra.mxu0 %v600
    %1049 = vmatpush.bf16.msra.mxu0 %v599
    %1050 = vmatpush.bf16.msra.mxu0 %v598
    %1051 = vmatpush.bf16.msra.mxu0 %v597
    %1052 = vmatpush.bf16.msra.mxu0 %v596
    %1053 = vmatmul.bf16.gmra.mxu0 %v893
    %v1054 = vpop.f32.mrf.mxu0
    %v1055 = vadd.f32 %v966, %v1054
    %v1056 = vpop.f32.mrf.mxu0
    %v1057 = vadd.f32 %v968, %v1056
    %1058 = vmatmul.bf16.gmra.mxu0 %v895
    %v1059 = vpop.f32.mrf.mxu0
    %v1060 = vadd.f32 %v971, %v1059
    %v1061 = vpop.f32.mrf.mxu0
    %v1062 = vadd.f32 %v973, %v1061
    %1063 = vmatmul.bf16.gmra.mxu0 %v897
    %v1064 = vpop.f32.mrf.mxu0
    %v1065 = vadd.f32 %v976, %v1064
    %v1066 = vpop.f32.mrf.mxu0
    %v1067 = vadd.f32 %v978, %v1066
    %1068 = vmatmul.bf16.gmra.mxu0 %v899
    %v1069 = vpop.f32.mrf.mxu0
    %v1070 = vadd.f32 %v981, %v1069
    %v1071 = vpop.f32.mrf.mxu0
    %v1072 = vadd.f32 %v983, %v1071
    %1073 = vmatmul.bf16.gmra.mxu0 %v901
    %v1074 = vpop.f32.mrf.mxu0
    %v1075 = vadd.f32 %v986, %v1074
    %v1076 = vpop.f32.mrf.mxu0
    %v1077 = vadd.f32 %v988, %v1076
    %1078 = vmatmul.bf16.gmra.mxu0 %v903
    %v1079 = vpop.f32.mrf.mxu0
    %v1080 = vadd.f32 %v991, %v1079
    %v1081 = vpop.f32.mrf.mxu0
    %v1082 = vadd.f32 %v993, %v1081
    %1083 = vmatmul.bf16.gmra.mxu0 %v905
    %v1084 = vpop.f32.mrf.mxu0
    %v1085 = vadd.f32 %v996, %v1084
    %v1086 = vpop.f32.mrf.mxu0
    %v1087 = vadd.f32 %v998, %v1086
    %1088 = vmatmul.bf16.gmra.mxu0 %v907
    %v1089 = vpop.f32.mrf.mxu0
    %v1090 = vadd.f32 %v1001, %v1089
    %v1091 = vpop.f32.mrf.mxu0
    %v1092 = vadd.f32 %v1003, %v1091
    %1093 = vmatmul.bf16.gmra.mxu0 %v909
    %v1094 = vpop.f32.mrf.mxu0
    %v1095 = vadd.f32 %v1006, %v1094
    %v1096 = vpop.f32.mrf.mxu0
    %v1097 = vadd.f32 %v1008, %v1096
    %1098 = vmatmul.bf16.gmra.mxu0 %v911
    %v1099 = vpop.f32.mrf.mxu0
    %v1100 = vadd.f32 %v1011, %v1099
    %v1101 = vpop.f32.mrf.mxu0
    %v1102 = vadd.f32 %v1013, %v1101
    %1103 = vmatmul.bf16.gmra.mxu0 %v913
    %v1104 = vpop.f32.mrf.mxu0
    %v1105 = vadd.f32 %v1016, %v1104
    %v1106 = vpop.f32.mrf.mxu0
    %v1107 = vadd.f32 %v1018, %v1106
    %1108 = vmatmul.bf16.gmra.mxu0 %v915
    %v1109 = vpop.f32.mrf.mxu0
    %v1110 = vadd.f32 %v1021, %v1109
    %v1111 = vpop.f32.mrf.mxu0
    %v1112 = vadd.f32 %v1023, %v1111
    %1113 = vmatmul.bf16.gmra.mxu0 %v917
    %v1114 = vpop.f32.mrf.mxu0
    %v1115 = vadd.f32 %v1026, %v1114
    %v1116 = vpop.f32.mrf.mxu0
    %v1117 = vadd.f32 %v1028, %v1116
    %1118 = vmatmul.bf16.gmra.mxu0 %v919
    %v1119 = vpop.f32.mrf.mxu0
    %v1120 = vadd.f32 %v1031, %v1119
    %v1121 = vpop.f32.mrf.mxu0
    %v1122 = vadd.f32 %v1033, %v1121
    %1123 = vmatmul.bf16.gmra.mxu0 %v921
    %v1124 = vpop.f32.mrf.mxu0
    %v1125 = vadd.f32 %v1036, %v1124
    %v1126 = vpop.f32.mrf.mxu0
    %v1127 = vadd.f32 %v1038, %v1126
    %1128 = vmatmul.bf16.gmra.mxu0 %v923
    %v1129 = vpop.f32.mrf.mxu0
    %v1130 = vadd.f32 %v1041, %v1129
    %v1131 = vpop.f32.mrf.mxu0
    %v1132 = vadd.f32 %v1043, %v1131
    %1133 = vdwg.mxu0
    %v1134 = vmax.f32 %v1055, 0.0
    %v1135 = vmax.f32 %v1057, 0.0
    %v1136 = vmax.f32 %v1060, 0.0
    %v1137 = vmax.f32 %v1062, 0.0
    %v1138 = vmax.f32 %v1065, 0.0
    %v1139 = vmax.f32 %v1067, 0.0
    %v1140 = vmax.f32 %v1070, 0.0
    %v1141 = vmax.f32 %v1072, 0.0
    %v1142 = vmax.f32 %v1075, 0.0
    %v1143 = vmax.f32 %v1077, 0.0
    %v1144 = vmax.f32 %v1080, 0.0
    %v1145 = vmax.f32 %v1082, 0.0
    %v1146 = vmax.f32 %v1085, 0.0
    %v1147 = vmax.f32 %v1087, 0.0
    %v1148 = vmax.f32 %v1090, 0.0
    %v1149 = vmax.f32 %v1092, 0.0
    %v1150 = vmax.f32 %v1095, 0.0
    %v1151 = vmax.f32 %v1097, 0.0
    %v1152 = vmax.f32 %v1100, 0.0
    %v1153 = vmax.f32 %v1102, 0.0
    %v1154 = vmax.f32 %v1105, 0.0
    %v1155 = vmax.f32 %v1107, 0.0
    %v1156 = vmax.f32 %v1110, 0.0
    %v1157 = vmax.f32 %v1112, 0.0
    %v1158 = vmax.f32 %v1115, 0.0
    %v1159 = vmax.f32 %v1117, 0.0
    %v1160 = vmax.f32 %v1120, 0.0
    %v1161 = vmax.f32 %v1122, 0.0
    %v1162 = vmax.f32 %v1125, 0.0
    %v1163 = vmax.f32 %v1127, 0.0
    %v1164 = vmax.f32 %v1130, 0.0
    %v1165 = vmax.f32 %v1132, 0.0
    %v1166 = vld [vmem:[%s5] sm:$0xff]
    %v1167 = vld [vmem:[%s5 + $0x8] sm:$0xff]
    %v1168 = vld [vmem:[%s5 + $0x10] sm:$0xff]
    %v1169 = vld [vmem:[%s5 + $0x18] sm:$0xff]
    %v1170 = vld [vmem:[%s5 + $0x20] sm:$0xff]
    %v1171 = vld [vmem:[%s5 + $0x28] sm:$0xff]
    %v1172 = vld [vmem:[%s5 + $0x30] sm:$0xff]
    %v1173 = vld [vmem:[%s5 + $0x38] sm:$0xff]
    %v1174 = vld [vmem:[%s5 + $0x40] sm:$0xff]
    %v1175 = vld [vmem:[%s5 + $0x48] sm:$0xff]
    %v1176 = vld [vmem:[%s5 + $0x50] sm:$0xff]
    %v1177 = vld [vmem:[%s5 + $0x58] sm:$0xff]
    %v1178 = vld [vmem:[%s5 + $0x60] sm:$0xff]
    %v1179 = vld [vmem:[%s5 + $0x68] sm:$0xff]
    %v1180 = vld [vmem:[%s5 + $0x70] sm:$0xff]
    %v1181 = vld [vmem:[%s5 + $0x78] sm:$0xff]
    %v1182 = vld [vmem:[%s5 + $0x80] sm:$0xff]
    %v1183 = vld [vmem:[%s5 + $0x88] sm:$0xff]
    %v1184 = vld [vmem:[%s5 + $0x90] sm:$0xff]
    %v1185 = vld [vmem:[%s5 + $0x98] sm:$0xff]
    %v1186 = vld [vmem:[%s5 + $0xa0] sm:$0xff]
    %v1187 = vld [vmem:[%s5 + $0xa8] sm:$0xff]
    %v1188 = vld [vmem:[%s5 + $0xb0] sm:$0xff]
    %v1189 = vld [vmem:[%s5 + $0xb8] sm:$0xff]
    %v1190 = vld [vmem:[%s5 + $0xc0] sm:$0xff]
    %v1191 = vld [vmem:[%s5 + $0xc8] sm:$0xff]
    %v1192 = vld [vmem:[%s5 + $0xd0] sm:$0xff]
    %v1193 = vld [vmem:[%s5 + $0xd8] sm:$0xff]
    %v1194 = vld [vmem:[%s5 + $0xe0] sm:$0xff]
    %v1195 = vld [vmem:[%s5 + $0xe8] sm:$0xff]
    %v1196 = vld [vmem:[%s5 + $0xf0] sm:$0xff]
    %v1197 = vld [vmem:[%s5 + $0xf8] sm:$0xff]
    %v1198 = vpack.c.bf16 %v1135, %v1134
    %v1199 = vpack.c.bf16 %v1137, %v1136
    %v1200 = vpack.c.bf16 %v1139, %v1138
    %v1201 = vpack.c.bf16 %v1141, %v1140
    %v1202 = vpack.c.bf16 %v1143, %v1142
    %v1203 = vpack.c.bf16 %v1145, %v1144
    %v1204 = vpack.c.bf16 %v1147, %v1146
    %v1205 = vpack.c.bf16 %v1149, %v1148
    %v1206 = vpack.c.bf16 %v1151, %v1150
    %v1207 = vpack.c.bf16 %v1153, %v1152
    %v1208 = vpack.c.bf16 %v1155, %v1154
    %v1209 = vpack.c.bf16 %v1157, %v1156
    %v1210 = vpack.c.bf16 %v1159, %v1158
    %v1211 = vpack.c.bf16 %v1161, %v1160
    %v1212 = vpack.c.bf16 %v1163, %v1162
    %v1213 = vpack.c.bf16 %v1165, %v1164
    %v1214 = vld [vmem:[%s6] sm:$0xff]
    %v1215 = vld [vmem:[%s6 + $0x8] sm:$0xff]
    %v1216 = vld [vmem:[%s6 + $0x10] sm:$0xff]
    %v1217 = vld [vmem:[%s6 + $0x18] sm:$0xff]
    %v1218 = vld [vmem:[%s6 + $0x20] sm:$0xff]
    %v1219 = vld [vmem:[%s6 + $0x28] sm:$0xff]
    %v1220 = vld [vmem:[%s6 + $0x30] sm:$0xff]
    %v1221 = vld [vmem:[%s6 + $0x38] sm:$0xff]
    %v1222 = vld [vmem:[%s6 + $0x40] sm:$0xff]
    %v1223 = vld [vmem:[%s6 + $0x48] sm:$0xff]
    %v1224 = vld [vmem:[%s6 + $0x50] sm:$0xff]
    %v1225 = vld [vmem:[%s6 + $0x58] sm:$0xff]
    %v1226 = vld [vmem:[%s6 + $0x60] sm:$0xff]
    %v1227 = vld [vmem:[%s6 + $0x68] sm:$0xff]
    %v1228 = vld [vmem:[%s6 + $0x70] sm:$0xff]
    %v1229 = vld [vmem:[%s6 + $0x78] sm:$0xff]
    %v1230 = vld [vmem:[%s6 + $0x80] sm:$0xff]
    %v1231 = vld [vmem:[%s6 + $0x88] sm:$0xff]
    %v1232 = vld [vmem:[%s6 + $0x90] sm:$0xff]
    %v1233 = vld [vmem:[%s6 + $0x98] sm:$0xff]
    %v1234 = vld [vmem:[%s6 + $0xa0] sm:$0xff]
    %v1235 = vld [vmem:[%s6 + $0xa8] sm:$0xff]
    %v1236 = vld [vmem:[%s6 + $0xb0] sm:$0xff]
    %v1237 = vld [vmem:[%s6 + $0xb8] sm:$0xff]
    %v1238 = vld [vmem:[%s6 + $0xc0] sm:$0xff]
    %v1239 = vld [vmem:[%s6 + $0xc8] sm:$0xff]
    %v1240 = vld [vmem:[%s6 + $0xd0] sm:$0xff]
    %v1241 = vld [vmem:[%s6 + $0xd8] sm:$0xff]
    %v1242 = vld [vmem:[%s6 + $0xe0] sm:$0xff]
    %v1243 = vld [vmem:[%s6 + $0xe8] sm:$0xff]
    %v1244 = vld [vmem:[%s6 + $0xf0] sm:$0xff]
    %v1245 = vld [vmem:[%s6 + $0xf8] sm:$0xff]
    %1247 = vset.pattern.permute.xlu0 0
    %1248 = vperm.xlu0 %1247, %v1214
    %v1249 = vpop.permute.xlu0 %1248
    %1252 = vset.pattern.permute.xlu0 0
    %1253 = vperm.xlu0 %1252, %v1215
    %v1254 = vpop.permute.xlu0 %1253
    %1257 = vset.pattern.permute.xlu0 0
    %1258 = vperm.xlu0 %1257, %v1216
    %v1259 = vpop.permute.xlu0 %1258
    %1262 = vset.pattern.permute.xlu0 0
    %1263 = vperm.xlu0 %1262, %v1217
    %v1264 = vpop.permute.xlu0 %1263
    %1267 = vset.pattern.permute.xlu0 0
    %1268 = vperm.xlu0 %1267, %v1218
    %v1269 = vpop.permute.xlu0 %1268
    %1272 = vset.pattern.permute.xlu0 0
    %1273 = vperm.xlu0 %1272, %v1219
    %v1274 = vpop.permute.xlu0 %1273
    %1277 = vset.pattern.permute.xlu0 0
    %1278 = vperm.xlu0 %1277, %v1220
    %v1279 = vpop.permute.xlu0 %1278
    %1282 = vset.pattern.permute.xlu0 0
    %1283 = vperm.xlu0 %1282, %v1221
    %v1284 = vpop.permute.xlu0 %1283
    %1287 = vset.pattern.permute.xlu0 0
    %1288 = vperm.xlu0 %1287, %v1222
    %v1289 = vpop.permute.xlu0 %1288
    %1292 = vset.pattern.permute.xlu0 0
    %1293 = vperm.xlu0 %1292, %v1223
    %v1294 = vpop.permute.xlu0 %1293
    %1297 = vset.pattern.permute.xlu0 0
    %1298 = vperm.xlu0 %1297, %v1224
    %v1299 = vpop.permute.xlu0 %1298
    %1302 = vset.pattern.permute.xlu0 0
    %1303 = vperm.xlu0 %1302, %v1225
    %v1304 = vpop.permute.xlu0 %1303
    %1307 = vset.pattern.permute.xlu0 0
    %1308 = vperm.xlu0 %1307, %v1226
    %v1309 = vpop.permute.xlu0 %1308
    %1312 = vset.pattern.permute.xlu0 0
    %1313 = vperm.xlu0 %1312, %v1227
    %v1314 = vpop.permute.xlu0 %1313
    %1317 = vset.pattern.permute.xlu0 0
    %1318 = vperm.xlu0 %1317, %v1228
    %v1319 = vpop.permute.xlu0 %1318
    %1322 = vset.pattern.permute.xlu0 0
    %1323 = vperm.xlu0 %1322, %v1229
    %v1324 = vpop.permute.xlu0 %1323
    %1327 = vset.pattern.permute.xlu0 0
    %1328 = vperm.xlu0 %1327, %v1230
    %v1329 = vpop.permute.xlu0 %1328
    %1332 = vset.pattern.permute.xlu0 0
    %1333 = vperm.xlu0 %1332, %v1231
    %v1334 = vpop.permute.xlu0 %1333
    %1337 = vset.pattern.permute.xlu0 0
    %1338 = vperm.xlu0 %1337, %v1232
    %v1339 = vpop.permute.xlu0 %1338
    %1342 = vset.pattern.permute.xlu0 0
    %1343 = vperm.xlu0 %1342, %v1233
    %v1344 = vpop.permute.xlu0 %1343
    %1347 = vset.pattern.permute.xlu0 0
    %1348 = vperm.xlu0 %1347, %v1234
    %v1349 = vpop.permute.xlu0 %1348
    %1352 = vset.pattern.permute.xlu0 0
    %1353 = vperm.xlu0 %1352, %v1235
    %v1354 = vpop.permute.xlu0 %1353
    %1357 = vset.pattern.permute.xlu0 0
    %1358 = vperm.xlu0 %1357, %v1236
    %v1359 = vpop.permute.xlu0 %1358
    %1362 = vset.pattern.permute.xlu0 0
    %1363 = vperm.xlu0 %1362, %v1237
    %v1364 = vpop.permute.xlu0 %1363
    %1367 = vset.pattern.permute.xlu0 0
    %1368 = vperm.xlu0 %1367, %v1238
    %v1369 = vpop.permute.xlu0 %1368
    %1372 = vset.pattern.permute.xlu0 0
    %1373 = vperm.xlu0 %1372, %v1239
    %v1374 = vpop.permute.xlu0 %1373
    %1377 = vset.pattern.permute.xlu0 0
    %1378 = vperm.xlu0 %1377, %v1240
    %v1379 = vpop.permute.xlu0 %1378
    %1382 = vset.pattern.permute.xlu0 0
    %1383 = vperm.xlu0 %1382, %v1241
    %v1384 = vpop.permute.xlu0 %1383
    %1387 = vset.pattern.permute.xlu0 0
    %1388 = vperm.xlu0 %1387, %v1242
    %v1389 = vpop.permute.xlu0 %1388
    %1392 = vset.pattern.permute.xlu0 0
    %1393 = vperm.xlu0 %1392, %v1243
    %v1394 = vpop.permute.xlu0 %1393
    %1397 = vset.pattern.permute.xlu0 0
    %1398 = vperm.xlu0 %1397, %v1244
    %v1399 = vpop.permute.xlu0 %1398
    %1402 = vset.pattern.permute.xlu0 0
    %1403 = vperm.xlu0 %1402, %v1245
    %v1404 = vpop.permute.xlu0 %1403
    %v1438 = vunpack.c.l.b16 %v1166
    %v1439 = vunpack.c.h.b16 %v1166
    %v1440 = vunpack.c.l.b16 %v1167
    %v1441 = vunpack.c.h.b16 %v1167
    %v1442 = vunpack.c.l.b16 %v1168
    %v1443 = vunpack.c.h.b16 %v1168
    %v1444 = vunpack.c.l.b16 %v1169
    %v1445 = vunpack.c.h.b16 %v1169
    %v1446 = vunpack.c.l.b16 %v1170
    %v1447 = vunpack.c.h.b16 %v1170
    %v1448 = vunpack.c.l.b16 %v1171
    %v1449 = vunpack.c.h.b16 %v1171
    %v1450 = vunpack.c.l.b16 %v1172
    %v1451 = vunpack.c.h.b16 %v1172
    %v1452 = vunpack.c.l.b16 %v1173
    %v1453 = vunpack.c.h.b16 %v1173
    %v1454 = vunpack.c.l.b16 %v1174
    %v1455 = vunpack.c.h.b16 %v1174
    %v1456 = vunpack.c.l.b16 %v1175
    %v1457 = vunpack.c.h.b16 %v1175
    %v1458 = vunpack.c.l.b16 %v1176
    %v1459 = vunpack.c.h.b16 %v1176
    %v1460 = vunpack.c.l.b16 %v1177
    %v1461 = vunpack.c.h.b16 %v1177
    %v1462 = vunpack.c.l.b16 %v1178
    %v1463 = vunpack.c.h.b16 %v1178
    %v1464 = vunpack.c.l.b16 %v1179
    %v1465 = vunpack.c.h.b16 %v1179
    %v1466 = vunpack.c.l.b16 %v1180
    %v1467 = vunpack.c.h.b16 %v1180
    %v1468 = vunpack.c.l.b16 %v1181
    %v1469 = vunpack.c.h.b16 %v1181
    %v1470 = vunpack.c.l.b16 %v1182
    %v1471 = vunpack.c.h.b16 %v1182
    %v1472 = vunpack.c.l.b16 %v1183
    %v1473 = vunpack.c.h.b16 %v1183
    %v1474 = vunpack.c.l.b16 %v1184
    %v1475 = vunpack.c.h.b16 %v1184
    %v1476 = vunpack.c.l.b16 %v1185
    %v1477 = vunpack.c.h.b16 %v1185
    %v1478 = vunpack.c.l.b16 %v1186
    %v1479 = vunpack.c.h.b16 %v1186
    %v1480 = vunpack.c.l.b16 %v1187
    %v1481 = vunpack.c.h.b16 %v1187
    %v1482 = vunpack.c.l.b16 %v1188
    %v1483 = vunpack.c.h.b16 %v1188
    %v1484 = vunpack.c.l.b16 %v1189
    %v1485 = vunpack.c.h.b16 %v1189
    %v1486 = vunpack.c.l.b16 %v1190
    %v1487 = vunpack.c.h.b16 %v1190
    %v1488 = vunpack.c.l.b16 %v1191
    %v1489 = vunpack.c.h.b16 %v1191
    %v1490 = vunpack.c.l.b16 %v1192
    %v1491 = vunpack.c.h.b16 %v1192
    %v1492 = vunpack.c.l.b16 %v1193
    %v1493 = vunpack.c.h.b16 %v1193
    %v1494 = vunpack.c.l.b16 %v1194
    %v1495 = vunpack.c.h.b16 %v1194
    %v1496 = vunpack.c.l.b16 %v1195
    %v1497 = vunpack.c.h.b16 %v1195
    %v1498 = vunpack.c.l.b16 %v1196
    %v1499 = vunpack.c.h.b16 %v1196
    %v1500 = vunpack.c.l.b16 %v1197
    %v1501 = vunpack.c.h.b16 %v1197
    %v1502 = vpack.c.b16 %v1440, %v1438
    %v1503 = vpack.c.b16 %v1441, %v1439
    %v1504 = vpack.c.b16 %v1444, %v1442
    %v1505 = vpack.c.b16 %v1445, %v1443
    %v1506 = vpack.c.b16 %v1448, %v1446
    %v1507 = vpack.c.b16 %v1449, %v1447
    %v1508 = vpack.c.b16 %v1452, %v1450
    %v1509 = vpack.c.b16 %v1453, %v1451
    %v1510 = vpack.c.b16 %v1456, %v1454
    %v1511 = vpack.c.b16 %v1457, %v1455
    %v1512 = vpack.c.b16 %v1460, %v1458
    %v1513 = vpack.c.b16 %v1461, %v1459
    %v1514 = vpack.c.b16 %v1464, %v1462
    %v1515 = vpack.c.b16 %v1465, %v1463
    %v1516 = vpack.c.b16 %v1468, %v1466
    %v1517 = vpack.c.b16 %v1469, %v1467
    %v1518 = vpack.c.b16 %v1472, %v1470
    %v1519 = vpack.c.b16 %v1473, %v1471
    %v1520 = vpack.c.b16 %v1476, %v1474
    %v1521 = vpack.c.b16 %v1477, %v1475
    %v1522 = vpack.c.b16 %v1480, %v1478
    %v1523 = vpack.c.b16 %v1481, %v1479
    %v1524 = vpack.c.b16 %v1484, %v1482
    %v1525 = vpack.c.b16 %v1485, %v1483
    %v1526 = vpack.c.b16 %v1488, %v1486
    %v1527 = vpack.c.b16 %v1489, %v1487
    %v1528 = vpack.c.b16 %v1492, %v1490
    %v1529 = vpack.c.b16 %v1493, %v1491
    %v1530 = vpack.c.b16 %v1496, %v1494
    %v1531 = vpack.c.b16 %v1497, %v1495
    %v1532 = vpack.c.b16 %v1500, %v1498
    %v1533 = vpack.c.b16 %v1501, %v1499
    %1566 = vmatpush.bf16.msra.mxu0 %v1205
    %1567 = vmatpush.bf16.msra.mxu0 %v1204
    %1568 = vmatpush.bf16.msra.mxu0 %v1203
    %1569 = vmatpush.bf16.msra.mxu0 %v1202
    %1570 = vmatpush.bf16.msra.mxu0 %v1201
    %1571 = vmatpush.bf16.msra.mxu0 %v1200
    %1572 = vmatpush.bf16.msra.mxu0 %v1199
    %1573 = vmatpush.bf16.msra.mxu0 %v1198
    %1574 = vmatmul.bf16.gmra.mxu0 %v1502
    %v1575 = vpop.f32.mrf.mxu0
    %v1576 = vadd.f32 %v1249, %v1575
    %v1577 = vpop.f32.mrf.mxu0
    %v1578 = vadd.f32 %v1254, %v1577
    %1579 = vmatmul.bf16.gmra.mxu0 %v1504
    %v1580 = vpop.f32.mrf.mxu0
    %v1581 = vadd.f32 %v1259, %v1580
    %v1582 = vpop.f32.mrf.mxu0
    %v1583 = vadd.f32 %v1264, %v1582
    %1584 = vmatmul.bf16.gmra.mxu0 %v1506
    %v1585 = vpop.f32.mrf.mxu0
    %v1586 = vadd.f32 %v1269, %v1585
    %v1587 = vpop.f32.mrf.mxu0
    %v1588 = vadd.f32 %v1274, %v1587
    %1589 = vmatmul.bf16.gmra.mxu0 %v1508
    %v1590 = vpop.f32.mrf.mxu0
    %v1591 = vadd.f32 %v1279, %v1590
    %v1592 = vpop.f32.mrf.mxu0
    %v1593 = vadd.f32 %v1284, %v1592
    %1594 = vmatmul.bf16.gmra.mxu0 %v1510
    %v1595 = vpop.f32.mrf.mxu0
    %v1596 = vadd.f32 %v1289, %v1595
    %v1597 = vpop.f32.mrf.mxu0
    %v1598 = vadd.f32 %v1294, %v1597
    %1599 = vmatmul.bf16.gmra.mxu0 %v1512
    %v1600 = vpop.f32.mrf.mxu0
    %v1601 = vadd.f32 %v1299, %v1600
    %v1602 = vpop.f32.mrf.mxu0
    %v1603 = vadd.f32 %v1304, %v1602
    %1604 = vmatmul.bf16.gmra.mxu0 %v1514
    %v1605 = vpop.f32.mrf.mxu0
    %v1606 = vadd.f32 %v1309, %v1605
    %v1607 = vpop.f32.mrf.mxu0
    %v1608 = vadd.f32 %v1314, %v1607
    %1609 = vmatmul.bf16.gmra.mxu0 %v1516
    %v1610 = vpop.f32.mrf.mxu0
    %v1611 = vadd.f32 %v1319, %v1610
    %v1612 = vpop.f32.mrf.mxu0
    %v1613 = vadd.f32 %v1324, %v1612
    %1614 = vmatmul.bf16.gmra.mxu0 %v1518
    %v1615 = vpop.f32.mrf.mxu0
    %v1616 = vadd.f32 %v1329, %v1615
    %v1617 = vpop.f32.mrf.mxu0
    %v1618 = vadd.f32 %v1334, %v1617
    %1619 = vmatmul.bf16.gmra.mxu0 %v1520
    %v1620 = vpop.f32.mrf.mxu0
    %v1621 = vadd.f32 %v1339, %v1620
    %v1622 = vpop.f32.mrf.mxu0
    %v1623 = vadd.f32 %v1344, %v1622
    %1624 = vmatmul.bf16.gmra.mxu0 %v1522
    %v1625 = vpop.f32.mrf.mxu0
    %v1626 = vadd.f32 %v1349, %v1625
    %v1627 = vpop.f32.mrf.mxu0
    %v1628 = vadd.f32 %v1354, %v1627
    %1629 = vmatmul.bf16.gmra.mxu0 %v1524
    %v1630 = vpop.f32.mrf.mxu0
    %v1631 = vadd.f32 %v1359, %v1630
    %v1632 = vpop.f32.mrf.mxu0
    %v1633 = vadd.f32 %v1364, %v1632
    %1634 = vmatmul.bf16.gmra.mxu0 %v1526
    %v1635 = vpop.f32.mrf.mxu0
    %v1636 = vadd.f32 %v1369, %v1635
    %v1637 = vpop.f32.mrf.mxu0
    %v1638 = vadd.f32 %v1374, %v1637
    %1639 = vmatmul.bf16.gmra.mxu0 %v1528
    %v1640 = vpop.f32.mrf.mxu0
    %v1641 = vadd.f32 %v1379, %v1640
    %v1642 = vpop.f32.mrf.mxu0
    %v1643 = vadd.f32 %v1384, %v1642
    %1644 = vmatmul.bf16.gmra.mxu0 %v1530
    %v1645 = vpop.f32.mrf.mxu0
    %v1646 = vadd.f32 %v1389, %v1645
    %v1647 = vpop.f32.mrf.mxu0
    %v1648 = vadd.f32 %v1394, %v1647
    %1649 = vmatmul.bf16.gmra.mxu0 %v1532
    %v1650 = vpop.f32.mrf.mxu0
    %v1651 = vadd.f32 %v1399, %v1650
    %v1652 = vpop.f32.mrf.mxu0
    %v1653 = vadd.f32 %v1404, %v1652
    %1654 = vdwg.mxu0
    %1655 = vmatpush.bf16.msra.mxu0 %v1213
    %1656 = vmatpush.bf16.msra.mxu0 %v1212
    %1657 = vmatpush.bf16.msra.mxu0 %v1211
    %1658 = vmatpush.bf16.msra.mxu0 %v1210
    %1659 = vmatpush.bf16.msra.mxu0 %v1209
    %1660 = vmatpush.bf16.msra.mxu0 %v1208
    %1661 = vmatpush.bf16.msra.mxu0 %v1207
    %1662 = vmatpush.bf16.msra.mxu0 %v1206
    %1663 = vmatmul.bf16.gmra.mxu0 %v1503
    %v1664 = vpop.f32.mrf.mxu0
    %v1665 = vadd.f32 %v1576, %v1664
    %v1666 = vpop.f32.mrf.mxu0
    %v1667 = vadd.f32 %v1578, %v1666
    %1668 = vmatmul.bf16.gmra.mxu0 %v1505
    %v1669 = vpop.f32.mrf.mxu0
    %v1670 = vadd.f32 %v1581, %v1669
    %v1671 = vpop.f32.mrf.mxu0
    %v1672 = vadd.f32 %v1583, %v1671
    %1673 = vmatmul.bf16.gmra.mxu0 %v1507
    %v1674 = vpop.f32.mrf.mxu0
    %v1675 = vadd.f32 %v1586, %v1674
    %v1676 = vpop.f32.mrf.mxu0
    %v1677 = vadd.f32 %v1588, %v1676
    %1678 = vmatmul.bf16.gmra.mxu0 %v1509
    %v1679 = vpop.f32.mrf.mxu0
    %v1680 = vadd.f32 %v1591, %v1679
    %v1681 = vpop.f32.mrf.mxu0
    %v1682 = vadd.f32 %v1593, %v1681
    %1683 = vmatmul.bf16.gmra.mxu0 %v1511
    %v1684 = vpop.f32.mrf.mxu0
    %v1685 = vadd.f32 %v1596, %v1684
    %v1686 = vpop.f32.mrf.mxu0
    %v1687 = vadd.f32 %v1598, %v1686
    %1688 = vmatmul.bf16.gmra.mxu0 %v1513
    %v1689 = vpop.f32.mrf.mxu0
    %v1690 = vadd.f32 %v1601, %v1689
    %v1691 = vpop.f32.mrf.mxu0
    %v1692 = vadd.f32 %v1603, %v1691
    %1693 = vmatmul.bf16.gmra.mxu0 %v1515
    %v1694 = vpop.f32.mrf.mxu0
    %v1695 = vadd.f32 %v1606, %v1694
    %v1696 = vpop.f32.mrf.mxu0
    %v1697 = vadd.f32 %v1608, %v1696
    %1698 = vmatmul.bf16.gmra.mxu0 %v1517
    %v1699 = vpop.f32.mrf.mxu0
    %v1700 = vadd.f32 %v1611, %v1699
    %v1701 = vpop.f32.mrf.mxu0
    %v1702 = vadd.f32 %v1613, %v1701
    %1703 = vmatmul.bf16.gmra.mxu0 %v1519
    %v1704 = vpop.f32.mrf.mxu0
    %v1705 = vadd.f32 %v1616, %v1704
    %v1706 = vpop.f32.mrf.mxu0
    %v1707 = vadd.f32 %v1618, %v1706
    %1708 = vmatmul.bf16.gmra.mxu0 %v1521
    %v1709 = vpop.f32.mrf.mxu0
    %v1710 = vadd.f32 %v1621, %v1709
    %v1711 = vpop.f32.mrf.mxu0
    %v1712 = vadd.f32 %v1623, %v1711
    %1713 = vmatmul.bf16.gmra.mxu0 %v1523
    %v1714 = vpop.f32.mrf.mxu0
    %v1715 = vadd.f32 %v1626, %v1714
    %v1716 = vpop.f32.mrf.mxu0
    %v1717 = vadd.f32 %v1628, %v1716
    %1718 = vmatmul.bf16.gmra.mxu0 %v1525
    %v1719 = vpop.f32.mrf.mxu0
    %v1720 = vadd.f32 %v1631, %v1719
    %v1721 = vpop.f32.mrf.mxu0
    %v1722 = vadd.f32 %v1633, %v1721
    %1723 = vmatmul.bf16.gmra.mxu0 %v1527
    %v1724 = vpop.f32.mrf.mxu0
    %v1725 = vadd.f32 %v1636, %v1724
    %v1726 = vpop.f32.mrf.mxu0
    %v1727 = vadd.f32 %v1638, %v1726
    %1728 = vmatmul.bf16.gmra.mxu0 %v1529
    %v1729 = vpop.f32.mrf.mxu0
    %v1730 = vadd.f32 %v1641, %v1729
    %v1731 = vpop.f32.mrf.mxu0
    %v1732 = vadd.f32 %v1643, %v1731
    %1733 = vmatmul.bf16.gmra.mxu0 %v1531
    %v1734 = vpop.f32.mrf.mxu0
    %v1735 = vadd.f32 %v1646, %v1734
    %v1736 = vpop.f32.mrf.mxu0
    %v1737 = vadd.f32 %v1648, %v1736
    %1738 = vmatmul.bf16.gmra.mxu0 %v1533
    %v1739 = vpop.f32.mrf.mxu0
    %v1740 = vadd.f32 %v1651, %v1739
    %v1741 = vpop.f32.mrf.mxu0
    %v1742 = vadd.f32 %v1653, %v1741
    %1743 = vdwg.mxu0
    %v1744 = vmax.f32 %v1665, 0.0
    %v1745 = vmax.f32 %v1667, 0.0
    %v1746 = vmax.f32 %v1670, 0.0
    %v1747 = vmax.f32 %v1672, 0.0
    %v1748 = vmax.f32 %v1675, 0.0
    %v1749 = vmax.f32 %v1677, 0.0
    %v1750 = vmax.f32 %v1680, 0.0
    %v1751 = vmax.f32 %v1682, 0.0
    %v1752 = vmax.f32 %v1685, 0.0
    %v1753 = vmax.f32 %v1687, 0.0
    %v1754 = vmax.f32 %v1690, 0.0
    %v1755 = vmax.f32 %v1692, 0.0
    %v1756 = vmax.f32 %v1695, 0.0
    %v1757 = vmax.f32 %v1697, 0.0
    %v1758 = vmax.f32 %v1700, 0.0
    %v1759 = vmax.f32 %v1702, 0.0
    %v1760 = vmax.f32 %v1705, 0.0
    %v1761 = vmax.f32 %v1707, 0.0
    %v1762 = vmax.f32 %v1710, 0.0
    %v1763 = vmax.f32 %v1712, 0.0
    %v1764 = vmax.f32 %v1715, 0.0
    %v1765 = vmax.f32 %v1717, 0.0
    %v1766 = vmax.f32 %v1720, 0.0
    %v1767 = vmax.f32 %v1722, 0.0
    %v1768 = vmax.f32 %v1725, 0.0
    %v1769 = vmax.f32 %v1727, 0.0
    %v1770 = vmax.f32 %v1730, 0.0
    %v1771 = vmax.f32 %v1732, 0.0
    %v1772 = vmax.f32 %v1735, 0.0
    %v1773 = vmax.f32 %v1737, 0.0
    %v1774 = vmax.f32 %v1740, 0.0
    %v1775 = vmax.f32 %v1742, 0.0
    %v1776 = vld [vmem:[%s7] sm:$0xff]
    %v1777 = vld [vmem:[%s7 + $0x8] sm:$0xff]
    %v1778 = vld [vmem:[%s7 + $0x10] sm:$0xff]
    %v1779 = vld [vmem:[%s7 + $0x18] sm:$0xff]
    %v1780 = vld [vmem:[%s7 + $0x20] sm:$0xff]
    %v1781 = vld [vmem:[%s7 + $0x28] sm:$0xff]
    %v1782 = vld [vmem:[%s7 + $0x30] sm:$0xff]
    %v1783 = vld [vmem:[%s7 + $0x38] sm:$0xff]
    %v1784 = vld [vmem:[%s7 + $0x40] sm:$0xff]
    %v1785 = vld [vmem:[%s7 + $0x48] sm:$0xff]
    %v1786 = vld [vmem:[%s7 + $0x50] sm:$0xff]
    %v1787 = vld [vmem:[%s7 + $0x58] sm:$0xff]
    %v1788 = vld [vmem:[%s7 + $0x60] sm:$0xff]
    %v1789 = vld [vmem:[%s7 + $0x68] sm:$0xff]
    %v1790 = vld [vmem:[%s7 + $0x70] sm:$0xff]
    %v1791 = vld [vmem:[%s7 + $0x78] sm:$0xff]
    %v1792 = vld [vmem:[%s7 + $0x80] sm:$0xff]
    %v1793 = vld [vmem:[%s7 + $0x88] sm:$0xff]
    %v1794 = vld [vmem:[%s7 + $0x90] sm:$0xff]
    %v1795 = vld [vmem:[%s7 + $0x98] sm:$0xff]
    %v1796 = vld [vmem:[%s7 + $0xa0] sm:$0xff]
    %v1797 = vld [vmem:[%s7 + $0xa8] sm:$0xff]
    %v1798 = vld [vmem:[%s7 + $0xb0] sm:$0xff]
    %v1799 = vld [vmem:[%s7 + $0xb8] sm:$0xff]
    %v1800 = vld [vmem:[%s7 + $0xc0] sm:$0xff]
    %v1801 = vld [vmem:[%s7 + $0xc8] sm:$0xff]
    %v1802 = vld [vmem:[%s7 + $0xd0] sm:$0xff]
    %v1803 = vld [vmem:[%s7 + $0xd8] sm:$0xff]
    %v1804 = vld [vmem:[%s7 + $0xe0] sm:$0xff]
    %v1805 = vld [vmem:[%s7 + $0xe8] sm:$0xff]
    %v1806 = vld [vmem:[%s7 + $0xf0] sm:$0xff]
    %v1807 = vld [vmem:[%s7 + $0xf8] sm:$0xff]
    %1809 = vset.pattern.permute.xlu0 0
    %1810 = vperm.xlu0 %1809, %v1776
    %v1811 = vpop.permute.xlu0 %1810
    %1814 = vset.pattern.permute.xlu0 0
    %1815 = vperm.xlu0 %1814, %v1777
    %v1816 = vpop.permute.xlu0 %1815
    %1819 = vset.pattern.permute.xlu0 0
    %1820 = vperm.xlu0 %1819, %v1778
    %v1821 = vpop.permute.xlu0 %1820
    %1824 = vset.pattern.permute.xlu0 0
    %1825 = vperm.xlu0 %1824, %v1779
    %v1826 = vpop.permute.xlu0 %1825
    %1829 = vset.pattern.permute.xlu0 0
    %1830 = vperm.xlu0 %1829, %v1780
    %v1831 = vpop.permute.xlu0 %1830
    %1834 = vset.pattern.permute.xlu0 0
    %1835 = vperm.xlu0 %1834, %v1781
    %v1836 = vpop.permute.xlu0 %1835
    %1839 = vset.pattern.permute.xlu0 0
    %1840 = vperm.xlu0 %1839, %v1782
    %v1841 = vpop.permute.xlu0 %1840
    %1844 = vset.pattern.permute.xlu0 0
    %1845 = vperm.xlu0 %1844, %v1783
    %v1846 = vpop.permute.xlu0 %1845
    %1849 = vset.pattern.permute.xlu0 0
    %1850 = vperm.xlu0 %1849, %v1784
    %v1851 = vpop.permute.xlu0 %1850
    %1854 = vset.pattern.permute.xlu0 0
    %1855 = vperm.xlu0 %1854, %v1785
    %v1856 = vpop.permute.xlu0 %1855
    %1859 = vset.pattern.permute.xlu0 0
    %1860 = vperm.xlu0 %1859, %v1786
    %v1861 = vpop.permute.xlu0 %1860
    %1864 = vset.pattern.permute.xlu0 0
    %1865 = vperm.xlu0 %1864, %v1787
    %v1866 = vpop.permute.xlu0 %1865
    %1869 = vset.pattern.permute.xlu0 0
    %1870 = vperm.xlu0 %1869, %v1788
    %v1871 = vpop.permute.xlu0 %1870
    %1874 = vset.pattern.permute.xlu0 0
    %1875 = vperm.xlu0 %1874, %v1789
    %v1876 = vpop.permute.xlu0 %1875
    %1879 = vset.pattern.permute.xlu0 0
    %1880 = vperm.xlu0 %1879, %v1790
    %v1881 = vpop.permute.xlu0 %1880
    %1884 = vset.pattern.permute.xlu0 0
    %1885 = vperm.xlu0 %1884, %v1791
    %v1886 = vpop.permute.xlu0 %1885
    %1889 = vset.pattern.permute.xlu0 0
    %1890 = vperm.xlu0 %1889, %v1792
    %v1891 = vpop.permute.xlu0 %1890
    %1894 = vset.pattern.permute.xlu0 0
    %1895 = vperm.xlu0 %1894, %v1793
    %v1896 = vpop.permute.xlu0 %1895
    %1899 = vset.pattern.permute.xlu0 0
    %1900 = vperm.xlu0 %1899, %v1794
    %v1901 = vpop.permute.xlu0 %1900
    %1904 = vset.pattern.permute.xlu0 0
    %1905 = vperm.xlu0 %1904, %v1795
    %v1906 = vpop.permute.xlu0 %1905
    %1909 = vset.pattern.permute.xlu0 0
    %1910 = vperm.xlu0 %1909, %v1796
    %v1911 = vpop.permute.xlu0 %1910
    %1914 = vset.pattern.permute.xlu0 0
    %1915 = vperm.xlu0 %1914, %v1797
    %v1916 = vpop.permute.xlu0 %1915
    %1919 = vset.pattern.permute.xlu0 0
    %1920 = vperm.xlu0 %1919, %v1798
    %v1921 = vpop.permute.xlu0 %1920
    %1924 = vset.pattern.permute.xlu0 0
    %1925 = vperm.xlu0 %1924, %v1799
    %v1926 = vpop.permute.xlu0 %1925
    %1929 = vset.pattern.permute.xlu0 0
    %1930 = vperm.xlu0 %1929, %v1800
    %v1931 = vpop.permute.xlu0 %1930
    %1934 = vset.pattern.permute.xlu0 0
    %1935 = vperm.xlu0 %1934, %v1801
    %v1936 = vpop.permute.xlu0 %1935
    %1939 = vset.pattern.permute.xlu0 0
    %1940 = vperm.xlu0 %1939, %v1802
    %v1941 = vpop.permute.xlu0 %1940
    %1944 = vset.pattern.permute.xlu0 0
    %1945 = vperm.xlu0 %1944, %v1803
    %v1946 = vpop.permute.xlu0 %1945
    %1949 = vset.pattern.permute.xlu0 0
    %1950 = vperm.xlu0 %1949, %v1804
    %v1951 = vpop.permute.xlu0 %1950
    %1954 = vset.pattern.permute.xlu0 0
    %1955 = vperm.xlu0 %1954, %v1805
    %v1956 = vpop.permute.xlu0 %1955
    %1959 = vset.pattern.permute.xlu0 0
    %1960 = vperm.xlu0 %1959, %v1806
    %v1961 = vpop.permute.xlu0 %1960
    %1964 = vset.pattern.permute.xlu0 0
    %1965 = vperm.xlu0 %1964, %v1807
    %v1966 = vpop.permute.xlu0 %1965
    %v1968 = vmul.f32 %v1744, %v1811
    %v1969 = vmul.f32 %v1745, %v1816
    %v1970 = vmul.f32 %v1746, %v1821
    %v1971 = vmul.f32 %v1747, %v1826
    %v1972 = vmul.f32 %v1748, %v1831
    %v1973 = vmul.f32 %v1749, %v1836
    %v1974 = vmul.f32 %v1750, %v1841
    %v1975 = vmul.f32 %v1751, %v1846
    %v1976 = vmul.f32 %v1752, %v1851
    %v1977 = vmul.f32 %v1753, %v1856
    %v1978 = vmul.f32 %v1754, %v1861
    %v1979 = vmul.f32 %v1755, %v1866
    %v1980 = vmul.f32 %v1756, %v1871
    %v1981 = vmul.f32 %v1757, %v1876
    %v1982 = vmul.f32 %v1758, %v1881
    %v1983 = vmul.f32 %v1759, %v1886
    %v1984 = vmul.f32 %v1760, %v1891
    %v1985 = vmul.f32 %v1761, %v1896
    %v1986 = vmul.f32 %v1762, %v1901
    %v1987 = vmul.f32 %v1763, %v1906
    %v1988 = vmul.f32 %v1764, %v1911
    %v1989 = vmul.f32 %v1765, %v1916
    %v1990 = vmul.f32 %v1766, %v1921
    %v1991 = vmul.f32 %v1767, %v1926
    %v1992 = vmul.f32 %v1768, %v1931
    %v1993 = vmul.f32 %v1769, %v1936
    %v1994 = vmul.f32 %v1770, %v1941
    %v1995 = vmul.f32 %v1771, %v1946
    %v1996 = vmul.f32 %v1772, %v1951
    %v1997 = vmul.f32 %v1773, %v1956
    %v1998 = vmul.f32 %v1774, %v1961
    %v1999 = vmul.f32 %v1775, %v1966
    %v2000 = vadd.f32 %v1968, %v1969
    %v2001 = vadd.f32 %v2000, %v1970
    %v2002 = vadd.f32 %v2001, %v1971
    %v2003 = vadd.f32 %v2002, %v1972
    %v2004 = vadd.f32 %v2003, %v1973
    %v2005 = vadd.f32 %v2004, %v1974
    %v2006 = vadd.f32 %v2005, %v1975
    %v2007 = vadd.f32 %v2006, %v1976
    %v2008 = vadd.f32 %v2007, %v1977
    %v2009 = vadd.f32 %v2008, %v1978
    %v2010 = vadd.f32 %v2009, %v1979
    %v2011 = vadd.f32 %v2010, %v1980
    %v2012 = vadd.f32 %v2011, %v1981
    %v2013 = vadd.f32 %v2012, %v1982
    %v2014 = vadd.f32 %v2013, %v1983
    %v2015 = vadd.f32 %v2014, %v1984
    %v2016 = vadd.f32 %v2015, %v1985
    %v2017 = vadd.f32 %v2016, %v1986
    %v2018 = vadd.f32 %v2017, %v1987
    %v2019 = vadd.f32 %v2018, %v1988
    %v2020 = vadd.f32 %v2019, %v1989
    %v2021 = vadd.f32 %v2020, %v1990
    %v2022 = vadd.f32 %v2021, %v1991
    %v2023 = vadd.f32 %v2022, %v1992
    %v2024 = vadd.f32 %v2023, %v1993
    %v2025 = vadd.f32 %v2024, %v1994
    %v2026 = vadd.f32 %v2025, %v1995
    %v2027 = vadd.f32 %v2026, %v1996
    %v2028 = vadd.f32 %v2027, %v1997
    %v2029 = vadd.f32 %v2028, %v1998
    %v2030 = vadd.f32 %v2029, %v1999
    %v2031 = vrot.slane %v2030, 4
    %v2032 = vadd.f32 %v2030, %v2031
    %v2033 = vrot.slane %v2032, 2
    %v2034 = vadd.f32 %v2032, %v2033
    %v2035 = vrot.slane %v2034, 1
    %v2036 = vadd.f32 %v2034, %v2035
    %s2037 = sld [smem:[#allocation2]]
    %v2038 = vstv %s2037
    %v2039 = vadd.f32 %v2036, %v2038
    %2040 = vst [vmem:[#allocation3] sm:$0x1] %v2039
    // Predicated region
    $region38: #{tpu_custom_call.1} parent=1 // pred_check
      _
    $region39: #{tpu_custom_call.1} parent=1 // pred_check_branch
      %2042 = sbr.rel (0) target = $region41
    $region40: #{tpu_custom_call.1} parent=1 // pred_region
      %2044 = vsyncadd [#allocation4], 0
      %s2046 = sshll.u32 [#allocation3], 4
      %s2047 = int_to_ptr.vmem [resolvable:$true] %s2046
      %s2048 = sshll.u32 %s9, 4
      %s2049 = int_to_ptr.hbm [resolvable:$true] %s2048
      %2051 = dma.vmem_to_hbm [thread:$0]  %s2047, 16, %s2049, [#allocation4]
    $region41: #{tpu_custom_call.1} parent=1 // pred_fallthru
      _
    // Predicated region
    $region42: #{tpu_custom_call.1} parent=1 // pred_check
      _
    $region43: #{tpu_custom_call.1} parent=1 // pred_check_branch
      %2053 = sbr.rel (0) target = $region45
    $region44: #{tpu_custom_call.1} parent=1 // pred_region
      %2055 = dma.done [#allocation4], 16
    $region45: #{tpu_custom_call.1} parent=1 // pred_fallthru
      _
    %2056 = vsyncpa [#allocation4], 1

</llo_original>
